<compile_context>
chip_gen: v7x
topology: tpu7x:2x2x1
jax: 0.10.0
libtpu: 0.0.40
codegen_flags: <defaults>
</compile_context>

<pallas_src>
import jax
import jax.numpy as jnp
from jax.experimental import pallas as pl
from jax.experimental.pallas import tpu as pltpu

EMB = 64                   # configuration['embedding_size']
HID = 4 * EMB              # 256
HEADS = 4                  # configuration['attention_head_count']
HEAD_SIZE = EMB // HEADS   # 16
LN_EPS = 1e-5
COMPUTE_DTYPE = jnp.bfloat16   # matmul operand dtype (accumulation stays f32)
TARGET_ROWS = 2048         # tokens per grid step (>= 512 KiB of f32 activation I/O)


def _block_kernel(x_ref, g1_ref, b1_ref, wqkv_ref, wproj_ref, bproj_ref,
                  g2_ref, b2_ref, w1_ref, bb1_ref, w2_ref, bb2_ref, o_ref):
    bt, T, E = x_ref.shape
    n = bt * T

    def mm(a, b):
        # bf16 operands, f32 accumulation; astype is a no-op when already bf16.
        return jnp.dot(a.astype(COMPUTE_DTYPE), b.astype(COMPUTE_DTYPE),
                       preferred_element_type=jnp.float32)

    def bmm(pattern, a, b):
        return jnp.einsum(pattern, a.astype(COMPUTE_DTYPE), b.astype(COMPUTE_DTYPE),
                          preferred_element_type=jnp.float32)

    def layer_norm(v, g, b):
        mu = jnp.mean(v, axis=-1, keepdims=True)
        c = v - mu
        var = jnp.mean(c * c, axis=-1, keepdims=True)
        return c * jax.lax.rsqrt(var + LN_EPS) * g + b

    x = x_ref[...].astype(jnp.float32).reshape(n, E)

    # ---- sub-layer 1: causal multi-head self-attention on LayerNorm1(x) ----
    xn1 = layer_norm(x, g1_ref[...], b1_ref[...])
    # Softmax scale (E**-0.5) is pre-folded into the Q columns of wqkv (host side).
    qkv = mm(xn1, wqkv_ref[...]).astype(COMPUTE_DTYPE)        # (n, 3E) bf16, cast once

    # Loop-invariant (T, T) causal mask; broadcasts over batch inside jnp.where.
    row = jax.lax.broadcasted_iota(jnp.int32, (T, T), 0)
    col = jax.lax.broadcasted_iota(jnp.int32, (T, T), 1)
    causal = col <= row

    head_outs = []
    for h in range(HEADS):                                    # static unroll, 4 heads
        lo = h * HEAD_SIZE
        hi = lo + HEAD_SIZE
        qh = qkv[:, lo:hi].reshape(bt, T, HEAD_SIZE)
        kh = qkv[:, E + lo:E + hi].reshape(bt, T, HEAD_SIZE)
        vh = qkv[:, 2 * E + lo:2 * E + hi].reshape(bt, T, HEAD_SIZE)
        s = bmm('btd,bsd->bts', qh, kh)                       # (bt,T,T) f32 (scale folded)
        s = jnp.where(causal, s, jnp.float32(-1e30))          # f32 scores: -1e30 is safe
        s = s - jnp.max(s, axis=-1, keepdims=True)
        p = jnp.exp(s)
        l = jnp.sum(p, axis=-1, keepdims=True)                # (bt, T, 1)
        oh = bmm('bts,bsd->btd', p, vh)                       # unnormalized head out
        # Normalize after p@v: multiply over 16 lanes instead of T; reciprocal on EUP.
        oh = oh * pl.reciprocal(l, approx=True)               # dropout(p=0.0) elided
        head_outs.append(oh.astype(COMPUTE_DTYPE).reshape(n, HEAD_SIZE))

    # Concatenate heads -> single K=64 projection matmul (vs 4x K=16 + VPU adds).
    attn = mm(jnp.concatenate(head_outs, axis=-1), wproj_ref[...])
    x = x + attn + bproj_ref[...]                             # residual 1

    # ---- sub-layer 2: FeedForward on LayerNorm2(x) ----
    xn2 = layer_norm(x, g2_ref[...], b2_ref[...])
    hidden = jnp.maximum(mm(xn2, w1_ref[...]) + bb1_ref[...], 0.0).astype(COMPUTE_DTYPE)
    x = x + mm(hidden, w2_ref[...]) + bb2_ref[...]            # residual 2 (dropout elided)

    o_ref[...] = x.reshape(bt, T, E).astype(o_ref.dtype)


def block_forward(x, params, *, b_tile=None, interpret=False):
    """x: (B, T, EMB) -> (B, T, EMB) transformer Block forward (dtype preserved)."""
    g1, b1, wqkv, wproj, bproj, g2, b2, w1, bb1, w2, bb2 = params
    B, T, E = x.shape
    assert E == EMB

    if b_tile is None:
        b_tile = max(1, min(B, TARGET_ROWS // max(T, 1)))
        if B >= 2:
            b_tile = min(b_tile, B // 2)   # grid >= 2: keep both v7x TensorCores busy
    while B % b_tile:                      # keep the batch axis evenly tiled
        b_tile -= 1
    grid = (B // b_tile,)

    # Fold the softmax scale (E**-0.5) into the Q columns, then cast matmul weights
    # to bf16 (f32 accumulation happens in-kernel). LN params and biases stay f32.
    wqkv_scaled = wqkv.at[:, :EMB].multiply(EMB ** -0.5)
    wqkv_c = wqkv_scaled.astype(COMPUTE_DTYPE)
    wproj_c = wproj.astype(COMPUTE_DTYPE)
    w1_c = w1.astype(COMPUTE_DTYPE)
    w2_c = w2.astype(COMPUTE_DTYPE)

    def full(arr):
        shape = arr.shape
        return pl.BlockSpec(shape, lambda i: (0,) * len(shape))

    grid_spec = pl.GridSpec(
        grid=grid,
        in_specs=[
            pl.BlockSpec((b_tile, T, E), lambda i: (i, 0, 0)),   # x: batch-tiled
            full(g1), full(b1),
            full(wqkv_c), full(wproj_c), full(bproj),
            full(g2), full(b2),
            full(w1_c), full(bb1), full(w2_c), full(bb2),
        ],
        out_specs=pl.BlockSpec((b_tile, T, E), lambda i: (i, 0, 0)),
    )

    return pl.pallas_call(
        _block_kernel,
        out_shape=jax.ShapeDtypeStruct((B, T, E), x.dtype),
        grid_spec=grid_spec,
        compiler_params=pltpu.CompilerParams(
            dimension_semantics=("parallel",),        # megacore-shardable on v7x
            vmem_limit_bytes=32 * 1024 * 1024),       # explicit: v5e default is 16 MiB
        interpret=interpret,
    )(x, g1, b1, wqkv_c, wproj_c, bproj, g2, b2, w1_c, bb1, w2_c, bb2)


def init_params(key):
    """Deterministic synthetic params mirroring the torch module's shapes.

    Per-head q/k/v weights (each torch (16,64), no bias) are stored concatenated
    and transposed as wqkv (64, 192) = [Q_all | K_all | V_all]; proj/FFN weights
    are stored transposed (fan_in, fan_out).  LN gammas near 1, betas near 0.
    """
    ks = jax.random.split(key, 11)
    be = 1.0 / (EMB ** 0.5)
    bh = 1.0 / (HID ** 0.5)

    def u(k, shape, b):
        return jax.random.uniform(k, shape, jnp.float32, -b, b)

    g1 = 1.0 + 0.1 * jax.random.normal(ks[0], (1, EMB), jnp.float32)
    b1 = 0.1 * jax.random.normal(ks[1], (1, EMB), jnp.float32)
    wqkv = u(ks[2], (EMB, 3 * EMB), be)
    wproj = u(ks[3], (EMB, EMB), be)
    bproj = u(ks[4], (1, EMB), be)
    g2 = 1.0 + 0.1 * jax.random.normal(ks[5], (1, EMB), jnp.float32)
    b2 = 0.1 * jax.random.normal(ks[6], (1, EMB), jnp.float32)
    w1 = u(ks[7], (EMB, HID), be)
    bb1 = u(ks[8], (1, HID), be)
    w2 = u(ks[9], (HID, EMB), bh)
    bb2 = u(ks[10], (1, EMB), bh)
    return (g1, b1, wqkv, wproj, bproj, g2, b2, w1, bb1, w2, bb2)


def block_ref(x, params):
    """Plain-JAX f32 reference with the same math as the torch Block."""
    g1, b1, wqkv, wproj, bproj, g2, b2, w1, bb1, w2, bb2 = params

    def ln(v, g, b):
        mu = v.mean(-1, keepdims=True)
        var = ((v - mu) ** 2).mean(-1, keepdims=True)
        return (v - mu) * jax.lax.rsqrt(var + LN_EPS) * g + b

    B, T, E = x.shape
    xn = ln(x, g1[0], b1[0])
    qkv = xn @ wqkv
    tril = jnp.tril(jnp.ones((T, T), bool))
    heads = []
    for h in range(HEADS):
        lo, hi = h * HEAD_SIZE, (h + 1) * HEAD_SIZE
        q = qkv[..., lo:hi]
        k = qkv[..., E + lo:E + hi]
        v = qkv[..., 2 * E + lo:2 * E + hi]
        s = jnp.einsum('btd,bsd->bts', q, k) * (E ** -0.5)   # torch scales by C
        s = jnp.where(tril, s, -jnp.inf)
        w = jax.nn.softmax(s, axis=-1)
        heads.append(jnp.einsum('bts,bsd->btd', w, v))
    x = x + jnp.concatenate(heads, -1) @ wproj + bproj[0]
    xn2 = ln(x, g2[0], b2[0])
    ffn = jnp.maximum(xn2 @ w1 + bb1[0], 0.0) @ w2 + bb2[0]
    return x + ffn


if __name__ == "__main__":
    key = jax.random.PRNGKey(0)
    kx, kp = jax.random.split(key)

    B, T = 4, 16                       # small shapes; T <= block_size (32)
    x = jax.random.normal(kx, (B, T, EMB), jnp.float32)
    params = init_params(kp)

    out = block_forward(x, params)     # auto b_tile -> 2, grid=(2,): exercises tiling
    out = jax.block_until_ready(out)

    ref = block_ref(x, params)
    assert out.shape == (B, T, EMB)
    # bf16 matmul operands (f32 accumulation) + approx reciprocal vs f32 reference.
    assert jnp.allclose(out, ref, atol=3e-2, rtol=3e-2), \
        float(jnp.max(jnp.abs(out - ref)))

    print("KERNEL_OK")
</pallas_src>

<mosaic_0001>
module attributes {stable_mosaic.version = 11 : i64} {
  func.func @_block_kernel(%arg0: i32, %arg1: memref<2x16x64xf32, #tpu.memory_space<vmem>>, %arg2: memref<1x64xf32, #tpu.memory_space<vmem>>, %arg3: memref<1x64xf32, #tpu.memory_space<vmem>>, %arg4: memref<64x192xbf16, #tpu.memory_space<vmem>>, %arg5: memref<64x64xbf16, #tpu.memory_space<vmem>>, %arg6: memref<1x64xf32, #tpu.memory_space<vmem>>, %arg7: memref<1x64xf32, #tpu.memory_space<vmem>>, %arg8: memref<1x64xf32, #tpu.memory_space<vmem>>, %arg9: memref<64x256xbf16, #tpu.memory_space<vmem>>, %arg10: memref<1x256xf32, #tpu.memory_space<vmem>>, %arg11: memref<256x64xbf16, #tpu.memory_space<vmem>>, %arg12: memref<1x64xf32, #tpu.memory_space<vmem>>, %arg13: memref<2x16x64xf32, #tpu.memory_space<vmem>>) attributes {dimension_semantics = [#tpu.dimension_semantics<parallel>], iteration_bounds = array<i64: 2>, scalar_prefetch = 0 : i64, scratch_operands = 0 : i64, tpu.core_type = #tpu.core_type<tc>, window_params = [{transform_indices = @transform_0, window_bounds = array<i64: 2, 16, 64>}, {pipeline_mode = #tpu.pipeline_mode<synchronous>, transform_indices = @transform_1, window_bounds = array<i64: 1, 64>}, {pipeline_mode = #tpu.pipeline_mode<synchronous>, transform_indices = @transform_2, window_bounds = array<i64: 1, 64>}, {pipeline_mode = #tpu.pipeline_mode<synchronous>, transform_indices = @transform_3, window_bounds = array<i64: 64, 192>}, {pipeline_mode = #tpu.pipeline_mode<synchronous>, transform_indices = @transform_4, window_bounds = array<i64: 64, 64>}, {pipeline_mode = #tpu.pipeline_mode<synchronous>, transform_indices = @transform_5, window_bounds = array<i64: 1, 64>}, {pipeline_mode = #tpu.pipeline_mode<synchronous>, transform_indices = @transform_6, window_bounds = array<i64: 1, 64>}, {pipeline_mode = #tpu.pipeline_mode<synchronous>, transform_indices = @transform_7, window_bounds = array<i64: 1, 64>}, {pipeline_mode = #tpu.pipeline_mode<synchronous>, transform_indices = @transform_8, window_bounds = array<i64: 64, 256>}, {pipeline_mode = #tpu.pipeline_mode<synchronous>, transform_indices = @transform_9, window_bounds = array<i64: 1, 256>}, {pipeline_mode = #tpu.pipeline_mode<synchronous>, transform_indices = @transform_10, window_bounds = array<i64: 256, 64>}, {pipeline_mode = #tpu.pipeline_mode<synchronous>, transform_indices = @transform_11, window_bounds = array<i64: 1, 64>}, {transform_indices = @transform_12, window_bounds = array<i64: 2, 16, 64>}]} {
    %c0 = arith.constant 0 : index
    %c0_0 = arith.constant 0 : index
    %c0_1 = arith.constant 0 : index
    %0 = vector.load %arg1[%c0, %c0_0, %c0_1] : memref<2x16x64xf32, #tpu.memory_space<vmem>>, vector<2x16x64xf32>
    %1 = vector.shape_cast %0 : vector<2x16x64xf32> to vector<32x64xf32>
    %c0_2 = arith.constant 0 : index
    %c0_3 = arith.constant 0 : index
    %2 = vector.load %arg2[%c0_2, %c0_3] : memref<1x64xf32, #tpu.memory_space<vmem>>, vector<1x64xf32>
    %c0_4 = arith.constant 0 : index
    %c0_5 = arith.constant 0 : index
    %3 = vector.load %arg3[%c0_4, %c0_5] : memref<1x64xf32, #tpu.memory_space<vmem>>, vector<1x64xf32>
    %cst = arith.constant dense<0.000000e+00> : vector<32xf32>
    %4 = vector.multi_reduction <add>, %1, %cst [1] : vector<32x64xf32> to vector<32xf32>
    %5 = vector.shape_cast %4 : vector<32xf32> to vector<32x1xf32>
    %cst_6 = arith.constant 6.400000e+01 : f32
    %6 = vector.broadcast %cst_6 : f32 to vector<32x1xf32>
    %7 = arith.divf %5, %6 : vector<32x1xf32>
    %8 = vector.broadcast %7 : vector<32x1xf32> to vector<32x64xf32>
    %9 = arith.subf %1, %8 : vector<32x64xf32>
    %10 = arith.mulf %9, %9 : vector<32x64xf32>
    %cst_7 = arith.constant dense<0.000000e+00> : vector<32xf32>
    %11 = vector.multi_reduction <add>, %10, %cst_7 [1] : vector<32x64xf32> to vector<32xf32>
    %12 = vector.shape_cast %11 : vector<32xf32> to vector<32x1xf32>
    %cst_8 = arith.constant 6.400000e+01 : f32
    %13 = vector.broadcast %cst_8 : f32 to vector<32x1xf32>
    %14 = arith.divf %12, %13 : vector<32x1xf32>
    %cst_9 = arith.constant 9.99999974E-6 : f32
    %15 = vector.broadcast %cst_9 : f32 to vector<32x1xf32>
    %16 = arith.addf %14, %15 : vector<32x1xf32>
    %17 = math.rsqrt %16 : vector<32x1xf32>
    %18 = vector.broadcast %17 : vector<32x1xf32> to vector<32x64xf32>
    %19 = arith.mulf %9, %18 : vector<32x64xf32>
    %20 = vector.broadcast %2 : vector<1x64xf32> to vector<32x64xf32>
    %21 = arith.mulf %19, %20 : vector<32x64xf32>
    %22 = vector.broadcast %3 : vector<1x64xf32> to vector<32x64xf32>
    %23 = arith.addf %21, %22 : vector<32x64xf32>
    %c0_10 = arith.constant 0 : index
    %c0_11 = arith.constant 0 : index
    %24 = vector.load %arg4[%c0_10, %c0_11] : memref<64x192xbf16, #tpu.memory_space<vmem>>, vector<64x192xbf16>
    %25 = arith.truncf %23 : vector<32x64xf32> to vector<32x64xbf16>
    %cst_12 = arith.constant dense<0.000000e+00> : vector<32x192xf32>
    %26 = tpu.matmul %25, %24, %cst_12 {dimension_numbers = #tpu.dot_dimension_numbers<[1], [0], [0], [1], [0, 0, 1, 1], [], []>} : vector<32x64xbf16>, vector<64x192xbf16>, vector<32x192xf32> -> vector<32x192xf32>
    %27 = arith.truncf %26 : vector<32x192xf32> to vector<32x192xbf16>
    %28 = tpu.iota {dimensions = array<i32: 0>} : vector<16x16xi32>
    %29 = tpu.iota {dimensions = array<i32: 1>} : vector<16x16xi32>
    %30 = arith.cmpi sle, %29, %28 : vector<16x16xi32>
    %31 = vector.extract_strided_slice %27 {offsets = [0, 0], sizes = [32, 16], strides = [1, 1]} : vector<32x192xbf16> to vector<32x16xbf16>
    %32 = vector.shape_cast %31 : vector<32x16xbf16> to vector<2x16x16xbf16>
    %33 = vector.extract_strided_slice %27 {offsets = [0, 64], sizes = [32, 16], strides = [1, 1]} : vector<32x192xbf16> to vector<32x16xbf16>
    %34 = vector.shape_cast %33 : vector<32x16xbf16> to vector<2x16x16xbf16>
    %35 = vector.extract_strided_slice %27 {offsets = [0, 128], sizes = [32, 16], strides = [1, 1]} : vector<32x192xbf16> to vector<32x16xbf16>
    %36 = vector.shape_cast %35 : vector<32x16xbf16> to vector<2x16x16xbf16>
    "tpu.trace_start"() <{level = 10 : i32, message = "btd,bsd->bts"}> : () -> ()
    %cst_13 = arith.constant dense<0.000000e+00> : vector<2x16x16xf32>
    %37 = tpu.matmul %32, %34, %cst_13 {dimension_numbers = #tpu.dot_dimension_numbers<[2], [2], [1], [1], [0, 0, 0, 1, 1, 1], [0], [0]>} : vector<2x16x16xbf16>, vector<2x16x16xbf16>, vector<2x16x16xf32> -> vector<2x16x16xf32>
    %cst_14 = arith.constant -1.000000e+30 : f32
    "tpu.trace_stop"() : () -> ()
    %38 = vector.shape_cast %30 : vector<16x16xi1> to vector<1x16x16xi1>
    %39 = vector.broadcast %38 : vector<1x16x16xi1> to vector<2x16x16xi1>
    %40 = vector.broadcast %cst_14 : f32 to vector<2x16x16xf32>
    %41 = arith.select %39, %37, %40 : vector<2x16x16xi1>, vector<2x16x16xf32>
    %cst_15 = arith.constant dense<0xFF800000> : vector<2x16xf32>
    %42 = vector.multi_reduction <maximumf>, %41, %cst_15 [2] : vector<2x16x16xf32> to vector<2x16xf32>
    %43 = vector.shape_cast %42 : vector<2x16xf32> to vector<2x16x1xf32>
    %44 = vector.broadcast %43 : vector<2x16x1xf32> to vector<2x16x16xf32>
    %45 = arith.subf %41, %44 : vector<2x16x16xf32>
    %46 = math.exp %45 : vector<2x16x16xf32>
    %cst_16 = arith.constant dense<0.000000e+00> : vector<2x16xf32>
    %47 = vector.multi_reduction <add>, %46, %cst_16 [2] : vector<2x16x16xf32> to vector<2x16xf32>
    %48 = vector.shape_cast %47 : vector<2x16xf32> to vector<2x16x1xf32>
    %49 = arith.truncf %46 : vector<2x16x16xf32> to vector<2x16x16xbf16>
    "tpu.trace_start"() <{level = 10 : i32, message = "bts,bsd->btd"}> : () -> ()
    %cst_17 = arith.constant dense<0.000000e+00> : vector<2x16x16xf32>
    %50 = tpu.matmul %49, %36, %cst_17 {dimension_numbers = #tpu.dot_dimension_numbers<[2], [1], [1], [2], [0, 0, 0, 1, 1, 2], [0], [0]>} : vector<2x16x16xbf16>, vector<2x16x16xbf16>, vector<2x16x16xf32> -> vector<2x16x16xf32>
    "tpu.trace_stop"() : () -> ()
    %51 = tpu.reciprocal %48 {approx = true} : vector<2x16x1xf32> -> vector<2x16x1xf32>
    %52 = vector.broadcast %51 : vector<2x16x1xf32> to vector<2x16x16xf32>
    %53 = arith.mulf %50, %52 : vector<2x16x16xf32>
    %54 = arith.truncf %53 : vector<2x16x16xf32> to vector<2x16x16xbf16>
    %55 = vector.shape_cast %54 : vector<2x16x16xbf16> to vector<32x16xbf16>
    %56 = vector.extract_strided_slice %27 {offsets = [0, 16], sizes = [32, 16], strides = [1, 1]} : vector<32x192xbf16> to vector<32x16xbf16>
    %57 = vector.shape_cast %56 : vector<32x16xbf16> to vector<2x16x16xbf16>
    %58 = vector.extract_strided_slice %27 {offsets = [0, 80], sizes = [32, 16], strides = [1, 1]} : vector<32x192xbf16> to vector<32x16xbf16>
    %59 = vector.shape_cast %58 : vector<32x16xbf16> to vector<2x16x16xbf16>
    %60 = vector.extract_strided_slice %27 {offsets = [0, 144], sizes = [32, 16], strides = [1, 1]} : vector<32x192xbf16> to vector<32x16xbf16>
    %61 = vector.shape_cast %60 : vector<32x16xbf16> to vector<2x16x16xbf16>
    "tpu.trace_start"() <{level = 10 : i32, message = "btd,bsd->bts"}> : () -> ()
    %cst_18 = arith.constant dense<0.000000e+00> : vector<2x16x16xf32>
    %62 = tpu.matmul %57, %59, %cst_18 {dimension_numbers = #tpu.dot_dimension_numbers<[2], [2], [1], [1], [0, 0, 0, 1, 1, 1], [0], [0]>} : vector<2x16x16xbf16>, vector<2x16x16xbf16>, vector<2x16x16xf32> -> vector<2x16x16xf32>
    %cst_19 = arith.constant -1.000000e+30 : f32
    "tpu.trace_stop"() : () -> ()
    %63 = vector.shape_cast %30 : vector<16x16xi1> to vector<1x16x16xi1>
    %64 = vector.broadcast %63 : vector<1x16x16xi1> to vector<2x16x16xi1>
    %65 = vector.broadcast %cst_19 : f32 to vector<2x16x16xf32>
    %66 = arith.select %64, %62, %65 : vector<2x16x16xi1>, vector<2x16x16xf32>
    %cst_20 = arith.constant dense<0xFF800000> : vector<2x16xf32>
    %67 = vector.multi_reduction <maximumf>, %66, %cst_20 [2] : vector<2x16x16xf32> to vector<2x16xf32>
    %68 = vector.shape_cast %67 : vector<2x16xf32> to vector<2x16x1xf32>
    %69 = vector.broadcast %68 : vector<2x16x1xf32> to vector<2x16x16xf32>
    %70 = arith.subf %66, %69 : vector<2x16x16xf32>
    %71 = math.exp %70 : vector<2x16x16xf32>
    %cst_21 = arith.constant dense<0.000000e+00> : vector<2x16xf32>
    %72 = vector.multi_reduction <add>, %71, %cst_21 [2] : vector<2x16x16xf32> to vector<2x16xf32>
    %73 = vector.shape_cast %72 : vector<2x16xf32> to vector<2x16x1xf32>
    %74 = arith.truncf %71 : vector<2x16x16xf32> to vector<2x16x16xbf16>
    "tpu.trace_start"() <{level = 10 : i32, message = "bts,bsd->btd"}> : () -> ()
    %cst_22 = arith.constant dense<0.000000e+00> : vector<2x16x16xf32>
    %75 = tpu.matmul %74, %61, %cst_22 {dimension_numbers = #tpu.dot_dimension_numbers<[2], [1], [1], [2], [0, 0, 0, 1, 1, 2], [0], [0]>} : vector<2x16x16xbf16>, vector<2x16x16xbf16>, vector<2x16x16xf32> -> vector<2x16x16xf32>
    "tpu.trace_stop"() : () -> ()
    %76 = tpu.reciprocal %73 {approx = true} : vector<2x16x1xf32> -> vector<2x16x1xf32>
    %77 = vector.broadcast %76 : vector<2x16x1xf32> to vector<2x16x16xf32>
    %78 = arith.mulf %75, %77 : vector<2x16x16xf32>
    %79 = arith.truncf %78 : vector<2x16x16xf32> to vector<2x16x16xbf16>
    %80 = vector.shape_cast %79 : vector<2x16x16xbf16> to vector<32x16xbf16>
    %81 = vector.extract_strided_slice %27 {offsets = [0, 32], sizes = [32, 16], strides = [1, 1]} : vector<32x192xbf16> to vector<32x16xbf16>
    %82 = vector.shape_cast %81 : vector<32x16xbf16> to vector<2x16x16xbf16>
    %83 = vector.extract_strided_slice %27 {offsets = [0, 96], sizes = [32, 16], strides = [1, 1]} : vector<32x192xbf16> to vector<32x16xbf16>
    %84 = vector.shape_cast %83 : vector<32x16xbf16> to vector<2x16x16xbf16>
    %85 = vector.extract_strided_slice %27 {offsets = [0, 160], sizes = [32, 16], strides = [1, 1]} : vector<32x192xbf16> to vector<32x16xbf16>
    %86 = vector.shape_cast %85 : vector<32x16xbf16> to vector<2x16x16xbf16>
    "tpu.trace_start"() <{level = 10 : i32, message = "btd,bsd->bts"}> : () -> ()
    %cst_23 = arith.constant dense<0.000000e+00> : vector<2x16x16xf32>
    %87 = tpu.matmul %82, %84, %cst_23 {dimension_numbers = #tpu.dot_dimension_numbers<[2], [2], [1], [1], [0, 0, 0, 1, 1, 1], [0], [0]>} : vector<2x16x16xbf16>, vector<2x16x16xbf16>, vector<2x16x16xf32> -> vector<2x16x16xf32>
    %cst_24 = arith.constant -1.000000e+30 : f32
    "tpu.trace_stop"() : () -> ()
    %88 = vector.shape_cast %30 : vector<16x16xi1> to vector<1x16x16xi1>
    %89 = vector.broadcast %88 : vector<1x16x16xi1> to vector<2x16x16xi1>
    %90 = vector.broadcast %cst_24 : f32 to vector<2x16x16xf32>
    %91 = arith.select %89, %87, %90 : vector<2x16x16xi1>, vector<2x16x16xf32>
    %cst_25 = arith.constant dense<0xFF800000> : vector<2x16xf32>
    %92 = vector.multi_reduction <maximumf>, %91, %cst_25 [2] : vector<2x16x16xf32> to vector<2x16xf32>
    %93 = vector.shape_cast %92 : vector<2x16xf32> to vector<2x16x1xf32>
    %94 = vector.broadcast %93 : vector<2x16x1xf32> to vector<2x16x16xf32>
    %95 = arith.subf %91, %94 : vector<2x16x16xf32>
    %96 = math.exp %95 : vector<2x16x16xf32>
    %cst_26 = arith.constant dense<0.000000e+00> : vector<2x16xf32>
    %97 = vector.multi_reduction <add>, %96, %cst_26 [2] : vector<2x16x16xf32> to vector<2x16xf32>
    %98 = vector.shape_cast %97 : vector<2x16xf32> to vector<2x16x1xf32>
    %99 = arith.truncf %96 : vector<2x16x16xf32> to vector<2x16x16xbf16>
    "tpu.trace_start"() <{level = 10 : i32, message = "bts,bsd->btd"}> : () -> ()
    %cst_27 = arith.constant dense<0.000000e+00> : vector<2x16x16xf32>
    %100 = tpu.matmul %99, %86, %cst_27 {dimension_numbers = #tpu.dot_dimension_numbers<[2], [1], [1], [2], [0, 0, 0, 1, 1, 2], [0], [0]>} : vector<2x16x16xbf16>, vector<2x16x16xbf16>, vector<2x16x16xf32> -> vector<2x16x16xf32>
    "tpu.trace_stop"() : () -> ()
    %101 = tpu.reciprocal %98 {approx = true} : vector<2x16x1xf32> -> vector<2x16x1xf32>
    %102 = vector.broadcast %101 : vector<2x16x1xf32> to vector<2x16x16xf32>
    %103 = arith.mulf %100, %102 : vector<2x16x16xf32>
    %104 = arith.truncf %103 : vector<2x16x16xf32> to vector<2x16x16xbf16>
    %105 = vector.shape_cast %104 : vector<2x16x16xbf16> to vector<32x16xbf16>
    %106 = vector.extract_strided_slice %27 {offsets = [0, 48], sizes = [32, 16], strides = [1, 1]} : vector<32x192xbf16> to vector<32x16xbf16>
    %107 = vector.shape_cast %106 : vector<32x16xbf16> to vector<2x16x16xbf16>
    %108 = vector.extract_strided_slice %27 {offsets = [0, 112], sizes = [32, 16], strides = [1, 1]} : vector<32x192xbf16> to vector<32x16xbf16>
    %109 = vector.shape_cast %108 : vector<32x16xbf16> to vector<2x16x16xbf16>
    %110 = vector.extract_strided_slice %27 {offsets = [0, 176], sizes = [32, 16], strides = [1, 1]} : vector<32x192xbf16> to vector<32x16xbf16>
    %111 = vector.shape_cast %110 : vector<32x16xbf16> to vector<2x16x16xbf16>
    "tpu.trace_start"() <{level = 10 : i32, message = "btd,bsd->bts"}> : () -> ()
    %cst_28 = arith.constant dense<0.000000e+00> : vector<2x16x16xf32>
    %112 = tpu.matmul %107, %109, %cst_28 {dimension_numbers = #tpu.dot_dimension_numbers<[2], [2], [1], [1], [0, 0, 0, 1, 1, 1], [0], [0]>} : vector<2x16x16xbf16>, vector<2x16x16xbf16>, vector<2x16x16xf32> -> vector<2x16x16xf32>
    %cst_29 = arith.constant -1.000000e+30 : f32
    "tpu.trace_stop"() : () -> ()
    %113 = vector.shape_cast %30 : vector<16x16xi1> to vector<1x16x16xi1>
    %114 = vector.broadcast %113 : vector<1x16x16xi1> to vector<2x16x16xi1>
    %115 = vector.broadcast %cst_29 : f32 to vector<2x16x16xf32>
    %116 = arith.select %114, %112, %115 : vector<2x16x16xi1>, vector<2x16x16xf32>
    %cst_30 = arith.constant dense<0xFF800000> : vector<2x16xf32>
    %117 = vector.multi_reduction <maximumf>, %116, %cst_30 [2] : vector<2x16x16xf32> to vector<2x16xf32>
    %118 = vector.shape_cast %117 : vector<2x16xf32> to vector<2x16x1xf32>
    %119 = vector.broadcast %118 : vector<2x16x1xf32> to vector<2x16x16xf32>
    %120 = arith.subf %116, %119 : vector<2x16x16xf32>
    %121 = math.exp %120 : vector<2x16x16xf32>
    %cst_31 = arith.constant dense<0.000000e+00> : vector<2x16xf32>
    %122 = vector.multi_reduction <add>, %121, %cst_31 [2] : vector<2x16x16xf32> to vector<2x16xf32>
    %123 = vector.shape_cast %122 : vector<2x16xf32> to vector<2x16x1xf32>
    %124 = arith.truncf %121 : vector<2x16x16xf32> to vector<2x16x16xbf16>
    "tpu.trace_start"() <{level = 10 : i32, message = "bts,bsd->btd"}> : () -> ()
    %cst_32 = arith.constant dense<0.000000e+00> : vector<2x16x16xf32>
    %125 = tpu.matmul %124, %111, %cst_32 {dimension_numbers = #tpu.dot_dimension_numbers<[2], [1], [1], [2], [0, 0, 0, 1, 1, 2], [0], [0]>} : vector<2x16x16xbf16>, vector<2x16x16xbf16>, vector<2x16x16xf32> -> vector<2x16x16xf32>
    "tpu.trace_stop"() : () -> ()
    %126 = tpu.reciprocal %123 {approx = true} : vector<2x16x1xf32> -> vector<2x16x1xf32>
    %127 = vector.broadcast %126 : vector<2x16x1xf32> to vector<2x16x16xf32>
    %128 = arith.mulf %125, %127 : vector<2x16x16xf32>
    %129 = arith.truncf %128 : vector<2x16x16xf32> to vector<2x16x16xbf16>
    %130 = vector.shape_cast %129 : vector<2x16x16xbf16> to vector<32x16xbf16>
    %131 = tpu.concatenate %55, %80, %105, %130 in 1 : vector<32x16xbf16>, vector<32x16xbf16>, vector<32x16xbf16>, vector<32x16xbf16> -> vector<32x64xbf16>
    %c0_33 = arith.constant 0 : index
    %c0_34 = arith.constant 0 : index
    %132 = vector.load %arg5[%c0_33, %c0_34] : memref<64x64xbf16, #tpu.memory_space<vmem>>, vector<64x64xbf16>
    %cst_35 = arith.constant dense<0.000000e+00> : vector<32x64xf32>
    %133 = tpu.matmul %131, %132, %cst_35 {dimension_numbers = #tpu.dot_dimension_numbers<[1], [0], [0], [1], [0, 0, 1, 1], [], []>} : vector<32x64xbf16>, vector<64x64xbf16>, vector<32x64xf32> -> vector<32x64xf32>
    %134 = arith.addf %1, %133 : vector<32x64xf32>
    %c0_36 = arith.constant 0 : index
    %c0_37 = arith.constant 0 : index
    %135 = vector.load %arg6[%c0_36, %c0_37] : memref<1x64xf32, #tpu.memory_space<vmem>>, vector<1x64xf32>
    %136 = vector.broadcast %135 : vector<1x64xf32> to vector<32x64xf32>
    %137 = arith.addf %134, %136 : vector<32x64xf32>
    %c0_38 = arith.constant 0 : index
    %c0_39 = arith.constant 0 : index
    %138 = vector.load %arg7[%c0_38, %c0_39] : memref<1x64xf32, #tpu.memory_space<vmem>>, vector<1x64xf32>
    %c0_40 = arith.constant 0 : index
    %c0_41 = arith.constant 0 : index
    %139 = vector.load %arg8[%c0_40, %c0_41] : memref<1x64xf32, #tpu.memory_space<vmem>>, vector<1x64xf32>
    %cst_42 = arith.constant dense<0.000000e+00> : vector<32xf32>
    %140 = vector.multi_reduction <add>, %137, %cst_42 [1] : vector<32x64xf32> to vector<32xf32>
    %141 = vector.shape_cast %140 : vector<32xf32> to vector<32x1xf32>
    %cst_43 = arith.constant 6.400000e+01 : f32
    %142 = vector.broadcast %cst_43 : f32 to vector<32x1xf32>
    %143 = arith.divf %141, %142 : vector<32x1xf32>
    %144 = vector.broadcast %143 : vector<32x1xf32> to vector<32x64xf32>
    %145 = arith.subf %137, %144 : vector<32x64xf32>
    %146 = arith.mulf %145, %145 : vector<32x64xf32>
    %cst_44 = arith.constant dense<0.000000e+00> : vector<32xf32>
    %147 = vector.multi_reduction <add>, %146, %cst_44 [1] : vector<32x64xf32> to vector<32xf32>
    %148 = vector.shape_cast %147 : vector<32xf32> to vector<32x1xf32>
    %cst_45 = arith.constant 6.400000e+01 : f32
    %149 = vector.broadcast %cst_45 : f32 to vector<32x1xf32>
    %150 = arith.divf %148, %149 : vector<32x1xf32>
    %cst_46 = arith.constant 9.99999974E-6 : f32
    %151 = vector.broadcast %cst_46 : f32 to vector<32x1xf32>
    %152 = arith.addf %150, %151 : vector<32x1xf32>
    %153 = math.rsqrt %152 : vector<32x1xf32>
    %154 = vector.broadcast %153 : vector<32x1xf32> to vector<32x64xf32>
    %155 = arith.mulf %145, %154 : vector<32x64xf32>
    %156 = vector.broadcast %138 : vector<1x64xf32> to vector<32x64xf32>
    %157 = arith.mulf %155, %156 : vector<32x64xf32>
    %158 = vector.broadcast %139 : vector<1x64xf32> to vector<32x64xf32>
    %159 = arith.addf %157, %158 : vector<32x64xf32>
    %c0_47 = arith.constant 0 : index
    %c0_48 = arith.constant 0 : index
    %160 = vector.load %arg9[%c0_47, %c0_48] : memref<64x256xbf16, #tpu.memory_space<vmem>>, vector<64x256xbf16>
    %161 = arith.truncf %159 : vector<32x64xf32> to vector<32x64xbf16>
    %cst_49 = arith.constant dense<0.000000e+00> : vector<32x256xf32>
    %162 = tpu.matmul %161, %160, %cst_49 {dimension_numbers = #tpu.dot_dimension_numbers<[1], [0], [0], [1], [0, 0, 1, 1], [], []>} : vector<32x64xbf16>, vector<64x256xbf16>, vector<32x256xf32> -> vector<32x256xf32>
    %c0_50 = arith.constant 0 : index
    %c0_51 = arith.constant 0 : index
    %163 = vector.load %arg10[%c0_50, %c0_51] : memref<1x256xf32, #tpu.memory_space<vmem>>, vector<1x256xf32>
    %164 = vector.broadcast %163 : vector<1x256xf32> to vector<32x256xf32>
    %165 = arith.addf %162, %164 : vector<32x256xf32>
    %cst_52 = arith.constant 0.000000e+00 : f32
    %166 = vector.broadcast %cst_52 : f32 to vector<32x256xf32>
    %167 = arith.maximumf %165, %166 : vector<32x256xf32>
    %168 = arith.truncf %167 : vector<32x256xf32> to vector<32x256xbf16>
    %c0_53 = arith.constant 0 : index
    %c0_54 = arith.constant 0 : index
    %169 = vector.load %arg11[%c0_53, %c0_54] : memref<256x64xbf16, #tpu.memory_space<vmem>>, vector<256x64xbf16>
    %cst_55 = arith.constant dense<0.000000e+00> : vector<32x64xf32>
    %170 = tpu.matmul %168, %169, %cst_55 {dimension_numbers = #tpu.dot_dimension_numbers<[1], [0], [0], [1], [0, 0, 1, 1], [], []>} : vector<32x256xbf16>, vector<256x64xbf16>, vector<32x64xf32> -> vector<32x64xf32>
    %171 = arith.addf %137, %170 : vector<32x64xf32>
    %c0_56 = arith.constant 0 : index
    %c0_57 = arith.constant 0 : index
    %172 = vector.load %arg12[%c0_56, %c0_57] : memref<1x64xf32, #tpu.memory_space<vmem>>, vector<1x64xf32>
    %173 = vector.broadcast %172 : vector<1x64xf32> to vector<32x64xf32>
    %174 = arith.addf %171, %173 : vector<32x64xf32>
    %175 = vector.shape_cast %174 : vector<32x64xf32> to vector<2x16x64xf32>
    %c0_58 = arith.constant 0 : index
    %c0_59 = arith.constant 0 : index
    %c0_60 = arith.constant 0 : index
    %176 = vector.load %arg13[%c0_58, %c0_59, %c0_60] : memref<2x16x64xf32, #tpu.memory_space<vmem>>, vector<2x16x64xf32>
    tpu.vector_store %arg13[%c0_58, %c0_59, %c0_60], %175 {strides = array<i32>} : memref<2x16x64xf32, #tpu.memory_space<vmem>>, vector<2x16x64xf32>,
    return
  }
  func.func @transform_0(%arg0: i32) -> (i32, i32, i32) {
    %c0_i32 = arith.constant 0 : i32
    %c0_i32_0 = arith.constant 0 : i32
    %c0_i32_1 = arith.constant 0 : i32
    return %arg0, %c0_i32, %c0_i32_0 : i32, i32, i32
  }
  func.func @transform_1(%arg0: i32) -> (i32, i32) {
    %c0_i32 = arith.constant 0 : i32
    %c0_i32_0 = arith.constant 0 : i32
    %c0_i32_1 = arith.constant 0 : i32
    return %c0_i32, %c0_i32_0 : i32, i32
  }
  func.func @transform_2(%arg0: i32) -> (i32, i32) {
    %c0_i32 = arith.constant 0 : i32
    %c0_i32_0 = arith.constant 0 : i32
    %c0_i32_1 = arith.constant 0 : i32
    return %c0_i32, %c0_i32_0 : i32, i32
  }
  func.func @transform_3(%arg0: i32) -> (i32, i32) {
    %c0_i32 = arith.constant 0 : i32
    %c0_i32_0 = arith.constant 0 : i32
    %c0_i32_1 = arith.constant 0 : i32
    return %c0_i32, %c0_i32_0 : i32, i32
  }
  func.func @transform_4(%arg0: i32) -> (i32, i32) {
    %c0_i32 = arith.constant 0 : i32
    %c0_i32_0 = arith.constant 0 : i32
    %c0_i32_1 = arith.constant 0 : i32
    return %c0_i32, %c0_i32_0 : i32, i32
  }
  func.func @transform_5(%arg0: i32) -> (i32, i32) {
    %c0_i32 = arith.constant 0 : i32
    %c0_i32_0 = arith.constant 0 : i32
    %c0_i32_1 = arith.constant 0 : i32
    return %c0_i32, %c0_i32_0 : i32, i32
  }
  func.func @transform_6(%arg0: i32) -> (i32, i32) {
    %c0_i32 = arith.constant 0 : i32
    %c0_i32_0 = arith.constant 0 : i32
    %c0_i32_1 = arith.constant 0 : i32
    return %c0_i32, %c0_i32_0 : i32, i32
  }
  func.func @transform_7(%arg0: i32) -> (i32, i32) {
    %c0_i32 = arith.constant 0 : i32
    %c0_i32_0 = arith.constant 0 : i32
    %c0_i32_1 = arith.constant 0 : i32
    return %c0_i32, %c0_i32_0 : i32, i32
  }
  func.func @transform_8(%arg0: i32) -> (i32, i32) {
    %c0_i32 = arith.constant 0 : i32
    %c0_i32_0 = arith.constant 0 : i32
    %c0_i32_1 = arith.constant 0 : i32
    return %c0_i32, %c0_i32_0 : i32, i32
  }
  func.func @transform_9(%arg0: i32) -> (i32, i32) {
    %c0_i32 = arith.constant 0 : i32
    %c0_i32_0 = arith.constant 0 : i32
    %c0_i32_1 = arith.constant 0 : i32
    return %c0_i32, %c0_i32_0 : i32, i32
  }
  func.func @transform_10(%arg0: i32) -> (i32, i32) {
    %c0_i32 = arith.constant 0 : i32
    %c0_i32_0 = arith.constant 0 : i32
    %c0_i32_1 = arith.constant 0 : i32
    return %c0_i32, %c0_i32_0 : i32, i32
  }
  func.func @transform_11(%arg0: i32) -> (i32, i32) {
    %c0_i32 = arith.constant 0 : i32
    %c0_i32_0 = arith.constant 0 : i32
    %c0_i32_1 = arith.constant 0 : i32
    return %c0_i32, %c0_i32_0 : i32, i32
  }
  func.func @transform_12(%arg0: i32) -> (i32, i32, i32) {
    %c0_i32 = arith.constant 0 : i32
    %c0_i32_0 = arith.constant 0 : i32
    %c0_i32_1 = arith.constant 0 : i32
    return %arg0, %c0_i32, %c0_i32_0 : i32, i32, i32
  }
}

</mosaic_0001>

<llo_original>
// kernel: tpu_custom_call.1
$region0: #{tpu_custom_call.1}
  #allocation0 [shape = 'u32[]', space=smem, size = 0x4, offset = 0x4, fixed_abs, tag = 'smem constant byte address 0x4 - core index']
  #allocation1 [shape = 'u32[144,128]{1,0:T(1,128)}', space=vmem, size = 0x12000, scoped, tag = 'internal scratch']
  %s0 = inlined_call_operand.vmem [shape: f32[4,16,64], index: 0, kind: input, shape index: {}]
  %s1 = inlined_call_operand.vmem [shape: f32[1,64], index: 1, kind: input, shape index: {}]
  %s2 = inlined_call_operand.vmem [shape: f32[1,64], index: 2, kind: input, shape index: {}]
  %s3 = inlined_call_operand.vmem [shape: bf16[64,192], index: 3, kind: input, shape index: {}]
  %s4 = inlined_call_operand.hbm [shape: bf16[64,64], index: 4, kind: input, shape index: {}]
  %s5 = inlined_call_operand.vmem [shape: f32[1,64], index: 5, kind: input, shape index: {}]
  %s6 = inlined_call_operand.vmem [shape: f32[1,64], index: 6, kind: input, shape index: {}]
  %s7 = inlined_call_operand.vmem [shape: f32[1,64], index: 7, kind: input, shape index: {}]
  %s8 = inlined_call_operand.vmem [shape: bf16[64,256], index: 8, kind: input, shape index: {}]
  %s9 = inlined_call_operand.vmem [shape: f32[1,256], index: 9, kind: input, shape index: {}]
  %s10 = inlined_call_operand.vmem [shape: bf16[256,64], index: 10, kind: input, shape index: {}]
  %s11 = inlined_call_operand.vmem [shape: f32[1,64], index: 11, kind: input, shape index: {}]
  %s12 = inlined_call_operand.hbm [shape: f32[4,16,64], index: 12, kind: output, shape index: {}]
  %s13 = sld [smem:[#allocation0]]
  $region85: #{tpu_custom_call.1} parent=0
    _
  %s15 = ssub.s32 1, %s13
  %s16 = scalar_select 0, %s15, %s13
  $region1: #{tpu_custom_call.1} parent=0
    #allocation2 [shape = 'u8[16384]{0}', space=vmem, size = 0x4000, scoped, tag = 'input window, operand 4, single buffered']
    #allocation3 [shape = 's32[2]{0}', space=sflag, size = 0x8, scoped, tag = 'scoped memory for tpu_custom_call.1']
    #allocation4 [shape = 's32[2]{0}', space=sflag, size = 0x8, scoped, tag = 'scoped memory for tpu_custom_call.1']
    #allocation5 [shape = 'u8[32768]{0}', space=vmem, size = 0x8000, scoped, tag = 'output window, operand 0']
    %17 = vsyncpa [#allocation3], 0
    %18 = vsyncpa [#allocation4], 0
    %s19 = scalar_lea.sflag [#allocation4], 1
    %20 = vsyncpa %s19, 0
    loop: start=0, step=1, limit=4
    $region2: #{tpu_custom_call.1} parent=1 // loop_pre_header
      _
    $region3: #{tpu_custom_call.1} parent=1 // loop_header
      %s22 = sphi 0, %s26
      %p23 = scmp.ge.s32.totalorder %s22, 4
      %s32 = sphi 0, %s34
      %s35 = sphi 0, %s32
      %s36 = sphi 0, %s35
      %s52 = sphi 0, %s36
      %s56 = sphi 0, %s56
      %s58 = sphi 0, %s56
      %s59 = sphi 0, %s58
      %s73 = sphi 0, %s59
      %s77 = sphi 0, %s77
      %s79 = sphi 0, %s77
      %s80 = sphi 0, %s79
      %s94 = sphi 0, %s80
      %s98 = sphi 0, %s98
      %s100 = sphi 0, %s98
      %s101 = sphi 0, %s100
      %s115 = sphi 0, %s101
      %s119 = sphi 0, %s119
      %s121 = sphi 0, %s119
      %s122 = sphi 0, %s121
      %s136 = sphi 0, %s122
      %s140 = sphi 0, %s140
      %s142 = sphi 0, %s140
      %s143 = sphi 0, %s142
      %s157 = sphi 0, %s143
      %s161 = sphi 0, %s161
      %s163 = sphi 0, %s161
      %s164 = sphi 0, %s163
      %s178 = sphi 0, %s164
      %s182 = sphi 0, %s182
      %s184 = sphi 0, %s182
      %s185 = sphi 0, %s184
      %s199 = sphi 0, %s185
      %s203 = sphi 0, %s203
      %s205 = sphi 0, %s203
      %s206 = sphi 0, %s205
      %s220 = sphi 0, %s206
      %s224 = sphi 0, %s224
      %s226 = sphi 0, %s224
      %s227 = sphi 0, %s226
      %s241 = sphi 0, %s227
      %s245 = sphi 0, %s245
      %s247 = sphi 0, %s245
      %s248 = sphi 0, %s247
      %s262 = sphi 0, %s248
      %s266 = sphi 0, %s266
      %s268 = sphi 0, %s266
      %s269 = sphi 0, %s268
      %s283 = sphi 0, %s269
      %s289 = sphi 0, %s291
      %s292 = sphi 0, %s289
      %s293 = sphi 0, %s292
      %s309 = sphi 0, %s293
    $region4: #{tpu_custom_call.1} parent=1 // loop_header_branch
      %25 = sbr.rel (%p23) target = $region8
    $region5: #{tpu_custom_call.1} parent=1 // loop_body
      %s27 = ssub.s32 %s22, 1
      %s28 = ssub.s32 %s22, 2
      %s29 = sadd.s32 %s22, 1
      %s30 = ssub.s32 %s22, %s29
      %p31 = scmp.eq.s32.totalorder %s30, 0
      %s33 = sadd.s32 %s32, 1
      %s34 = scalar_select %p31, %s32, %s33
      %p37 = pneg %p31
      %p38 = scmp.eq.s32.totalorder %s22, 1
      %p39 = por %p37, %p38
      %p40 = scmp.ne.s32.totalorder %s32, %s35
      %p41 = scmp.eq.s32.totalorder %s22, 0
      %p42 = por %p40, %p41
      %p43 = scmp.ne.s32.totalorder %s32, %s35
      %p44 = scmp.eq.s32.totalorder %s27, 1
      %p45 = por %p43, %p44
      %p46 = scmp.ne.s32.totalorder %s35, %s36
      %p47 = scmp.eq.s32.totalorder %s27, 0
      %p48 = por %p46, %p47
      %p49 = scmp.ne.s32.totalorder %s35, %s36
      %p50 = scmp.eq.s32.totalorder %s28, 1
      %p51 = por %p49, %p50
      %p53 = scmp.ne.s32.totalorder %s36, %s52
      %p54 = scmp.eq.s32.totalorder %s28, 0
      %p55 = por %p53, %p54
      %s57 = sadd.s32 %s56, 1
      %p60 = scmp.eq.s32.totalorder %s22, 1
      %p61 = scmp.ne.s32.totalorder %s56, %s58
      %p62 = scmp.eq.s32.totalorder %s22, 0
      %p63 = por %p61, %p62
      %p64 = scmp.ne.s32.totalorder %s56, %s58
      %p65 = scmp.eq.s32.totalorder %s27, 1
      %p66 = por %p64, %p65
      %p67 = scmp.ne.s32.totalorder %s58, %s59
      %p68 = scmp.eq.s32.totalorder %s27, 0
      %p69 = por %p67, %p68
      %p70 = scmp.ne.s32.totalorder %s58, %s59
      %p71 = scmp.eq.s32.totalorder %s28, 1
      %p72 = por %p70, %p71
      %p74 = scmp.ne.s32.totalorder %s59, %s73
      %p75 = scmp.eq.s32.totalorder %s28, 0
      %p76 = por %p74, %p75
      %s78 = sadd.s32 %s77, 1
      %p81 = scmp.eq.s32.totalorder %s22, 1
      %p82 = scmp.ne.s32.totalorder %s77, %s79
      %p83 = scmp.eq.s32.totalorder %s22, 0
      %p84 = por %p82, %p83
      %p85 = scmp.ne.s32.totalorder %s77, %s79
      %p86 = scmp.eq.s32.totalorder %s27, 1
      %p87 = por %p85, %p86
      %p88 = scmp.ne.s32.totalorder %s79, %s80
      %p89 = scmp.eq.s32.totalorder %s27, 0
      %p90 = por %p88, %p89
      %p91 = scmp.ne.s32.totalorder %s79, %s80
      %p92 = scmp.eq.s32.totalorder %s28, 1
      %p93 = por %p91, %p92
      %p95 = scmp.ne.s32.totalorder %s80, %s94
      %p96 = scmp.eq.s32.totalorder %s28, 0
      %p97 = por %p95, %p96
      %s99 = sadd.s32 %s98, 1
      %p102 = scmp.eq.s32.totalorder %s22, 1
      %p103 = scmp.ne.s32.totalorder %s98, %s100
      %p104 = scmp.eq.s32.totalorder %s22, 0
      %p105 = por %p103, %p104
      %p106 = scmp.ne.s32.totalorder %s98, %s100
      %p107 = scmp.eq.s32.totalorder %s27, 1
      %p108 = por %p106, %p107
      %p109 = scmp.ne.s32.totalorder %s100, %s101
      %p110 = scmp.eq.s32.totalorder %s27, 0
      %p111 = por %p109, %p110
      %p112 = scmp.ne.s32.totalorder %s100, %s101
      %p113 = scmp.eq.s32.totalorder %s28, 1
      %p114 = por %p112, %p113
      %p116 = scmp.ne.s32.totalorder %s101, %s115
      %p117 = scmp.eq.s32.totalorder %s28, 0
      %p118 = por %p116, %p117
      %s120 = sadd.s32 %s119, 1
      %p123 = scmp.eq.s32.totalorder %s22, 1
      %p124 = scmp.ne.s32.totalorder %s119, %s121
      %p125 = scmp.eq.s32.totalorder %s22, 0
      %p126 = por %p124, %p125
      %p127 = scmp.ne.s32.totalorder %s119, %s121
      %p128 = scmp.eq.s32.totalorder %s27, 1
      %p129 = por %p127, %p128
      %p130 = scmp.ne.s32.totalorder %s121, %s122
      %p131 = scmp.eq.s32.totalorder %s27, 0
      %p132 = por %p130, %p131
      %p133 = scmp.ne.s32.totalorder %s121, %s122
      %p134 = scmp.eq.s32.totalorder %s28, 1
      %p135 = por %p133, %p134
      %p137 = scmp.ne.s32.totalorder %s122, %s136
      %p138 = scmp.eq.s32.totalorder %s28, 0
      %p139 = por %p137, %p138
      %s141 = sadd.s32 %s140, 1
      %p144 = scmp.eq.s32.totalorder %s22, 1
      %p145 = scmp.ne.s32.totalorder %s140, %s142
      %p146 = scmp.eq.s32.totalorder %s22, 0
      %p147 = por %p145, %p146
      %p148 = scmp.ne.s32.totalorder %s140, %s142
      %p149 = scmp.eq.s32.totalorder %s27, 1
      %p150 = por %p148, %p149
      %p151 = scmp.ne.s32.totalorder %s142, %s143
      %p152 = scmp.eq.s32.totalorder %s27, 0
      %p153 = por %p151, %p152
      %p154 = scmp.ne.s32.totalorder %s142, %s143
      %p155 = scmp.eq.s32.totalorder %s28, 1
      %p156 = por %p154, %p155
      %p158 = scmp.ne.s32.totalorder %s143, %s157
      %p159 = scmp.eq.s32.totalorder %s28, 0
      %p160 = por %p158, %p159
      %s162 = sadd.s32 %s161, 1
      %p165 = scmp.eq.s32.totalorder %s22, 1
      %p166 = scmp.ne.s32.totalorder %s161, %s163
      %p167 = scmp.eq.s32.totalorder %s22, 0
      %p168 = por %p166, %p167
      %p169 = scmp.ne.s32.totalorder %s161, %s163
      %p170 = scmp.eq.s32.totalorder %s27, 1
      %p171 = por %p169, %p170
      %p172 = scmp.ne.s32.totalorder %s163, %s164
      %p173 = scmp.eq.s32.totalorder %s27, 0
      %p174 = por %p172, %p173
      %p175 = scmp.ne.s32.totalorder %s163, %s164
      %p176 = scmp.eq.s32.totalorder %s28, 1
      %p177 = por %p175, %p176
      %p179 = scmp.ne.s32.totalorder %s164, %s178
      %p180 = scmp.eq.s32.totalorder %s28, 0
      %p181 = por %p179, %p180
      %s183 = sadd.s32 %s182, 1
      %p186 = scmp.eq.s32.totalorder %s22, 1
      %p187 = scmp.ne.s32.totalorder %s182, %s184
      %p188 = scmp.eq.s32.totalorder %s22, 0
      %p189 = por %p187, %p188
      %p190 = scmp.ne.s32.totalorder %s182, %s184
      %p191 = scmp.eq.s32.totalorder %s27, 1
      %p192 = por %p190, %p191
      %p193 = scmp.ne.s32.totalorder %s184, %s185
      %p194 = scmp.eq.s32.totalorder %s27, 0
      %p195 = por %p193, %p194
      %p196 = scmp.ne.s32.totalorder %s184, %s185
      %p197 = scmp.eq.s32.totalorder %s28, 1
      %p198 = por %p196, %p197
      %p200 = scmp.ne.s32.totalorder %s185, %s199
      %p201 = scmp.eq.s32.totalorder %s28, 0
      %p202 = por %p200, %p201
      %s204 = sadd.s32 %s203, 1
      %p207 = scmp.eq.s32.totalorder %s22, 1
      %p208 = scmp.ne.s32.totalorder %s203, %s205
      %p209 = scmp.eq.s32.totalorder %s22, 0
      %p210 = por %p208, %p209
      %p211 = scmp.ne.s32.totalorder %s203, %s205
      %p212 = scmp.eq.s32.totalorder %s27, 1
      %p213 = por %p211, %p212
      %p214 = scmp.ne.s32.totalorder %s205, %s206
      %p215 = scmp.eq.s32.totalorder %s27, 0
      %p216 = por %p214, %p215
      %p217 = scmp.ne.s32.totalorder %s205, %s206
      %p218 = scmp.eq.s32.totalorder %s28, 1
      %p219 = por %p217, %p218
      %p221 = scmp.ne.s32.totalorder %s206, %s220
      %p222 = scmp.eq.s32.totalorder %s28, 0
      %p223 = por %p221, %p222
      %s225 = sadd.s32 %s224, 1
      %p228 = scmp.eq.s32.totalorder %s22, 1
      %p229 = scmp.ne.s32.totalorder %s224, %s226
      %p230 = scmp.eq.s32.totalorder %s22, 0
      %p231 = por %p229, %p230
      %p232 = scmp.ne.s32.totalorder %s224, %s226
      %p233 = scmp.eq.s32.totalorder %s27, 1
      %p234 = por %p232, %p233
      %p235 = scmp.ne.s32.totalorder %s226, %s227
      %p236 = scmp.eq.s32.totalorder %s27, 0
      %p237 = por %p235, %p236
      %p238 = scmp.ne.s32.totalorder %s226, %s227
      %p239 = scmp.eq.s32.totalorder %s28, 1
      %p240 = por %p238, %p239
      %p242 = scmp.ne.s32.totalorder %s227, %s241
      %p243 = scmp.eq.s32.totalorder %s28, 0
      %p244 = por %p242, %p243
      %s246 = sadd.s32 %s245, 1
      %p249 = scmp.eq.s32.totalorder %s22, 1
      %p250 = scmp.ne.s32.totalorder %s245, %s247
      %p251 = scmp.eq.s32.totalorder %s22, 0
      %p252 = por %p250, %p251
      %p253 = scmp.ne.s32.totalorder %s245, %s247
      %p254 = scmp.eq.s32.totalorder %s27, 1
      %p255 = por %p253, %p254
      %p256 = scmp.ne.s32.totalorder %s247, %s248
      %p257 = scmp.eq.s32.totalorder %s27, 0
      %p258 = por %p256, %p257
      %p259 = scmp.ne.s32.totalorder %s247, %s248
      %p260 = scmp.eq.s32.totalorder %s28, 1
      %p261 = por %p259, %p260
      %p263 = scmp.ne.s32.totalorder %s248, %s262
      %p264 = scmp.eq.s32.totalorder %s28, 0
      %p265 = por %p263, %p264
      %s267 = sadd.s32 %s266, 1
      %p270 = scmp.eq.s32.totalorder %s22, 1
      %p271 = scmp.ne.s32.totalorder %s266, %s268
      %p272 = scmp.eq.s32.totalorder %s22, 0
      %p273 = por %p271, %p272
      %p274 = scmp.ne.s32.totalorder %s266, %s268
      %p275 = scmp.eq.s32.totalorder %s27, 1
      %p276 = por %p274, %p275
      %p277 = scmp.ne.s32.totalorder %s268, %s269
      %p278 = scmp.eq.s32.totalorder %s27, 0
      %p279 = por %p277, %p278
      %p280 = scmp.ne.s32.totalorder %s268, %s269
      %p281 = scmp.eq.s32.totalorder %s28, 1
      %p282 = por %p280, %p281
      %p284 = scmp.ne.s32.totalorder %s269, %s283
      %p285 = scmp.eq.s32.totalorder %s28, 0
      %p286 = por %p284, %p285
      %s287 = ssub.s32 %s22, %s29
      %p288 = scmp.eq.s32.totalorder %s287, 0
      %s290 = sadd.s32 %s289, 1
      %s291 = scalar_select %p288, %s289, %s290
      %p294 = pneg %p288
      %p295 = scmp.eq.s32.totalorder %s22, 1
      %p296 = por %p294, %p295
      %p297 = scmp.ne.s32.totalorder %s289, %s292
      %p298 = scmp.eq.s32.totalorder %s22, 0
      %p299 = por %p297, %p298
      %p300 = scmp.ne.s32.totalorder %s289, %s292
      %p301 = scmp.eq.s32.totalorder %s27, 1
      %p302 = por %p300, %p301
      %p303 = scmp.ne.s32.totalorder %s292, %s293
      %p304 = scmp.eq.s32.totalorder %s27, 0
      %p305 = por %p303, %p304
      %p306 = scmp.ne.s32.totalorder %s292, %s293
      %p307 = scmp.eq.s32.totalorder %s28, 1
      %p308 = por %p306, %p307
      %p310 = scmp.ne.s32.totalorder %s293, %s309
      %p311 = scmp.eq.s32.totalorder %s28, 0
      %p312 = por %p310, %p311
      %p313 = scmp.le.s32.totalorder 1, %s22
      %p314 = scmp.lt.s32.totalorder %s22, 3
      %p315 = pnand %p313, %p314
      %p316 = pneg %p315
      // Predicated region
      $region9: #{tpu_custom_call.1} parent=5 // pred_check
        _
      $region10: #{tpu_custom_call.1} parent=5 // pred_check_branch
        %318 = sbr.rel (%p315) target = $region12
      $region11: #{tpu_custom_call.1} parent=5 // pred_region
        %s319 = ssub.s32 %s22, 1
        // Predicated region
        $region13: #{tpu_custom_call.1} parent=11 // pred_check
          %p320 = pneg %p69
        $region14: #{tpu_custom_call.1} parent=11 // pred_check_branch
          %322 = sbr.rel (%p320) target = $region16
        $region15: #{tpu_custom_call.1} parent=11 // pred_region
          _
        $region16: #{tpu_custom_call.1} parent=11 // pred_fallthru
          _
        // Predicated region
        $region17: #{tpu_custom_call.1} parent=11 // pred_check
          %p323 = pneg %p90
        $region18: #{tpu_custom_call.1} parent=11 // pred_check_branch
          %325 = sbr.rel (%p323) target = $region20
        $region19: #{tpu_custom_call.1} parent=11 // pred_region
          _
        $region20: #{tpu_custom_call.1} parent=11 // pred_fallthru
          _
        // Predicated region
        $region21: #{tpu_custom_call.1} parent=11 // pred_check
          %p326 = pneg %p111
        $region22: #{tpu_custom_call.1} parent=11 // pred_check_branch
          %328 = sbr.rel (%p326) target = $region24
        $region23: #{tpu_custom_call.1} parent=11 // pred_region
          _
        $region24: #{tpu_custom_call.1} parent=11 // pred_fallthru
          _
        // Predicated region
        $region25: #{tpu_custom_call.1} parent=11 // pred_check
          %p329 = pneg %p132
        $region26: #{tpu_custom_call.1} parent=11 // pred_check_branch
          %331 = sbr.rel (%p329) target = $region28
        $region27: #{tpu_custom_call.1} parent=11 // pred_region
          %s333 = ssub.s32 512, 512
          %334 = vsyncadd [#allocation3], %s333
          %s335 = sshll.u32 [#allocation2], 4
          %s336 = int_to_ptr.vmem [resolvable:$true] %s335
          %341 = dma.hbm_to_vmem [thread:$0]  %s4, 512, %s336, [#allocation3], 64, 64, 4
        $region28: #{tpu_custom_call.1} parent=11 // pred_fallthru
          _
        // Predicated region
        $region29: #{tpu_custom_call.1} parent=11 // pred_check
          %p342 = pneg %p153
        $region30: #{tpu_custom_call.1} parent=11 // pred_check_branch
          %344 = sbr.rel (%p342) target = $region32
        $region31: #{tpu_custom_call.1} parent=11 // pred_region
          _
        $region32: #{tpu_custom_call.1} parent=11 // pred_fallthru
          _
        // Predicated region
        $region33: #{tpu_custom_call.1} parent=11 // pred_check
          %p345 = pneg %p174
        $region34: #{tpu_custom_call.1} parent=11 // pred_check_branch
          %347 = sbr.rel (%p345) target = $region36
        $region35: #{tpu_custom_call.1} parent=11 // pred_region
          _
        $region36: #{tpu_custom_call.1} parent=11 // pred_fallthru
          _
        // Predicated region
        $region37: #{tpu_custom_call.1} parent=11 // pred_check
          %p348 = pneg %p195
        $region38: #{tpu_custom_call.1} parent=11 // pred_check_branch
          %350 = sbr.rel (%p348) target = $region40
        $region39: #{tpu_custom_call.1} parent=11 // pred_region
          _
        $region40: #{tpu_custom_call.1} parent=11 // pred_fallthru
          _
        // Predicated region
        $region41: #{tpu_custom_call.1} parent=11 // pred_check
          %p351 = pneg %p216
        $region42: #{tpu_custom_call.1} parent=11 // pred_check_branch
          %353 = sbr.rel (%p351) target = $region44
        $region43: #{tpu_custom_call.1} parent=11 // pred_region
          _
        $region44: #{tpu_custom_call.1} parent=11 // pred_fallthru
          _
        // Predicated region
        $region45: #{tpu_custom_call.1} parent=11 // pred_check
          %p354 = pneg %p237
        $region46: #{tpu_custom_call.1} parent=11 // pred_check_branch
          %356 = sbr.rel (%p354) target = $region48
        $region47: #{tpu_custom_call.1} parent=11 // pred_region
          _
        $region48: #{tpu_custom_call.1} parent=11 // pred_fallthru
          _
        // Predicated region
        $region49: #{tpu_custom_call.1} parent=11 // pred_check
          %p357 = pneg %p258
        $region50: #{tpu_custom_call.1} parent=11 // pred_check_branch
          %359 = sbr.rel (%p357) target = $region52
        $region51: #{tpu_custom_call.1} parent=11 // pred_region
          _
        $region52: #{tpu_custom_call.1} parent=11 // pred_fallthru
          _
        // Predicated region
        $region53: #{tpu_custom_call.1} parent=11 // pred_check
          %p360 = pneg %p279
        $region54: #{tpu_custom_call.1} parent=11 // pred_check_branch
          %362 = sbr.rel (%p360) target = $region56
        $region55: #{tpu_custom_call.1} parent=11 // pred_region
          _
        $region56: #{tpu_custom_call.1} parent=11 // pred_fallthru
          _
      $region12: #{tpu_custom_call.1} parent=5 // pred_fallthru
        _
      %p363 = scmp.lt.s32.totalorder %s22, 2
      // Predicated region
      $region57: #{tpu_custom_call.1} parent=5 // pred_check
        %p364 = pneg %p363
      $region58: #{tpu_custom_call.1} parent=5 // pred_check_branch
        %366 = sbr.rel (%p364) target = $region60
      $region59: #{tpu_custom_call.1} parent=5 // pred_region
        // Predicated region
        $region61: #{tpu_custom_call.1} parent=59 // pred_check
          %p367 = pneg %p42
        $region62: #{tpu_custom_call.1} parent=59 // pred_check_branch
          %369 = sbr.rel (%p367) target = $region64
        $region63: #{tpu_custom_call.1} parent=59 // pred_region
          %s370 = smul.u32 2, %s22
          %p371 = scmp.lt.s32.totalorder %s370, 3
          %s372 = scalar_select %p371, %s370, 3
          %s373 = smul.addr %s372, 2
          %s374 = smul.addr %s373, 8
          %s375 = scalar_lea.vmem %s0, %s374
          %s376 = smul.u32 2, %s22
        $region64: #{tpu_custom_call.1} parent=59 // pred_fallthru
          _
      $region60: #{tpu_custom_call.1} parent=5 // pred_fallthru
        _
      %p377 = scmp.le.s32.totalorder 1, %s22
      %p378 = scmp.lt.s32.totalorder %s22, 3
      %p379 = pnand %p377, %p378
      %p380 = pneg %p379
      // Predicated region
      $region65: #{tpu_custom_call.1} parent=5 // pred_check
        _
      $region66: #{tpu_custom_call.1} parent=5 // pred_check_branch
        %382 = sbr.rel (%p379) target = $region68
      $region67: #{tpu_custom_call.1} parent=5 // pred_region
        %s383 = ssub.s32 %s22, 1
        // Predicated region
        $region69: #{tpu_custom_call.1} parent=67 // pred_check
          %p384 = pneg %p132
        $region70: #{tpu_custom_call.1} parent=67 // pred_check_branch
          %386 = sbr.rel (%p384) target = $region72
        $region71: #{tpu_custom_call.1} parent=67 // pred_region
          %387 = dma.done [#allocation3], 512
        $region72: #{tpu_custom_call.1} parent=67 // pred_fallthru
          _
        %s388 = smul.u32 2, %s27
        %p389 = scmp.lt.s32.totalorder %s388, 3
        %s390 = scalar_select %p389, %s388, 3
        %s391 = smul.addr %s390, 2
        %s392 = smul.addr %s391, 8
        %s393 = scalar_lea.vmem %s0, %s392
        %p394 = pneg %p48
        %p395 = pneg %p45
        %p396 = pneg %p69
        %p397 = pneg %p66
        %p398 = pneg %p90
        %p399 = pneg %p87
        %p400 = pneg %p111
        %p401 = pneg %p108
        %p402 = pneg %p132
        %p403 = pneg %p129
        %p404 = pneg %p153
        %p405 = pneg %p150
        %p406 = pneg %p174
        %p407 = pneg %p171
        %p408 = pneg %p195
        %p409 = pneg %p192
        %p410 = pneg %p216
        %p411 = pneg %p213
        %p412 = pneg %p237
        %p413 = pneg %p234
        %p414 = pneg %p258
        %p415 = pneg %p255
        %p416 = pneg %p279
        %p417 = pneg %p276
        %p418 = pneg %p305
        %p419 = pneg %p302
        %s420 = sand.u32 %s292, 1
        %s421 = scalar_lea.sflag [#allocation4], %s420
        %s422 = sand.u32 %s292, 1
        %s423 = smul.addr %s422, 32
        %s424 = scalar_lea.vmem [#allocation5], %s423
        %s425 = smul.u32 2, %s27
        %p426 = scmp.lt.s32.totalorder %s425, 3
        %s427 = scalar_select %p426, %s425, 3
        %s428 = smul.addr %s427, 2
        %s429 = smul.addr %s428, 8
        %s430 = scalar_lea.vmem %s0, %s429
        %s431 = smul.u32 2, %s27
        %s432 = smul.u32 2, %s27
        %v434 = vld [vmem:[%s430] sm:$0xff]
        %v435 = vld [vmem:[%s430 + $0x8] sm:$0xff]
        %v436 = vld [vmem:[%s430 + $0x10] sm:$0xff]
        %v437 = vld [vmem:[%s430 + $0x18] sm:$0xff]
        %v438 = vld [vmem:[%s1] sm:$0x1]
        %v439 = vld [vmem:[%s2] sm:$0x1]
        %vm440 = vcmask 523264
        %v441 = vsel %vm440, %v434, 0.0
        %442 = vadd.xlane.f32.xlu0 %v441
        %v443 = vpop.xlane.xlu0 %442
        %v444 = vsel %vm440, %v435, 0.0
        %445 = vadd.xlane.f32.xlu0 %v444
        %v446 = vpop.xlane.xlu0 %445
        %v447 = vsel %vm440, %v436, 0.0
        %448 = vadd.xlane.f32.xlu0 %v447
        %v449 = vpop.xlane.xlu0 %448
        %v450 = vsel %vm440, %v437, 0.0
        %451 = vadd.xlane.f32.xlu0 %v450
        %v452 = vpop.xlane.xlu0 %451
        %v453 = vrcp.pop 64.0
        %v454 = vmul.f32 %v443, %v453
        %v455 = vmul.f32 %v446, %v453
        %v456 = vmul.f32 %v449, %v453
        %v457 = vmul.f32 %v452, %v453
        %v458 = vsub.f32 %v434, %v454
        %v459 = vsub.f32 %v435, %v455
        %v460 = vsub.f32 %v436, %v456
        %v461 = vsub.f32 %v437, %v457
        %v462 = vmul.f32 %v458, %v458
        %v463 = vmul.f32 %v459, %v459
        %v464 = vmul.f32 %v460, %v460
        %v465 = vmul.f32 %v461, %v461
        %v466 = vsel %vm440, %v462, 0.0
        %467 = vadd.xlane.f32.xlu0 %v466
        %v468 = vpop.xlane.xlu0 %467
        %v469 = vsel %vm440, %v463, 0.0
        %470 = vadd.xlane.f32.xlu0 %v469
        %v471 = vpop.xlane.xlu0 %470
        %v472 = vsel %vm440, %v464, 0.0
        %473 = vadd.xlane.f32.xlu0 %v472
        %v474 = vpop.xlane.xlu0 %473
        %v475 = vsel %vm440, %v465, 0.0
        %476 = vadd.xlane.f32.xlu0 %v475
        %v477 = vpop.xlane.xlu0 %476
        %v478 = vmul.f32 %v468, %v453
        %v479 = vmul.f32 %v471, %v453
        %v480 = vmul.f32 %v474, %v453
        %v481 = vmul.f32 %v477, %v453
        %v482 = vadd.f32 %v478, 1e-05
        %v483 = vadd.f32 %v479, 1e-05
        %v484 = vadd.f32 %v480, 1e-05
        %v485 = vadd.f32 %v481, 1e-05
        %v486 = vrsqrt.pop %v482
        %v487 = vrsqrt.pop %v483
        %v488 = vrsqrt.pop %v484
        %v489 = vrsqrt.pop %v485
        %v490 = vmul.f32 %v458, %v486
        %v491 = vmul.f32 %v459, %v487
        %v492 = vmul.f32 %v460, %v488
        %v493 = vmul.f32 %v461, %v489
        %v495 = vlaneseq
        %v496 = vshrl.u32 %v495, 7
        %v497 = vsub.s32 0, %v496
        %v498 = vrot.slane %v438, %v497
        %v500 = vmul.f32 %v490, %v498
        %v501 = vmul.f32 %v491, %v498
        %v502 = vmul.f32 %v492, %v498
        %v503 = vmul.f32 %v493, %v498
        %v505 = vlaneseq
        %v506 = vshrl.u32 %v505, 7
        %v507 = vsub.s32 0, %v506
        %v508 = vrot.slane %v439, %v507
        %v510 = vadd.f32 %v500, %v508
        %v511 = vadd.f32 %v501, %v508
        %v512 = vadd.f32 %v502, %v508
        %v513 = vadd.f32 %v503, %v508
        %v514 = vld [vmem:[%s3] sm:$0xff]
        %v515 = vld [vmem:[%s3 + $0x8] sm:$0xff]
        %v516 = vld [vmem:[%s3 + $0x10] sm:$0xff]
        %v517 = vld [vmem:[%s3 + $0x18] sm:$0xff]
        %v518 = vld [vmem:[%s3 + $0x20] sm:$0xff]
        %v519 = vld [vmem:[%s3 + $0x28] sm:$0xff]
        %v520 = vld [vmem:[%s3 + $0x30] sm:$0xff]
        %v521 = vld [vmem:[%s3 + $0x38] sm:$0xff]
        %v522 = vpack.c.bf16 %v511, %v510
        %v523 = vpack.c.bf16 %v513, %v512
        %v532 = vunpack.c.l.b16 %v514
        %v533 = vunpack.c.h.b16 %v514
        %v534 = vunpack.c.l.b16 %v515
        %v535 = vunpack.c.h.b16 %v515
        %v536 = vunpack.c.l.b16 %v516
        %v537 = vunpack.c.h.b16 %v516
        %v538 = vunpack.c.l.b16 %v517
        %v539 = vunpack.c.h.b16 %v517
        %v540 = vunpack.c.l.b16 %v518
        %v541 = vunpack.c.h.b16 %v518
        %v542 = vunpack.c.l.b16 %v519
        %v543 = vunpack.c.h.b16 %v519
        %v544 = vunpack.c.l.b16 %v520
        %v545 = vunpack.c.h.b16 %v520
        %v546 = vunpack.c.l.b16 %v521
        %v547 = vunpack.c.h.b16 %v521
        %v548 = vpack.c.b16 %v534, %v532
        %v549 = vpack.c.b16 %v535, %v533
        %v550 = vpack.c.b16 %v538, %v536
        %v551 = vpack.c.b16 %v539, %v537
        %v552 = vpack.c.b16 %v542, %v540
        %v553 = vpack.c.b16 %v543, %v541
        %v554 = vpack.c.b16 %v546, %v544
        %v555 = vpack.c.b16 %v547, %v545
        %v565 = vsel %vm440, %v522, 0
        %v568 = vsel %vm440, %v523, 0
        %570 = vmatprep.subr.bf16.mxu0 %v549
        %571 = vmatpush1.bf16.msra.mxu0 %v548
        %572 = vmatprep.subr.bf16.mxu0 %v551
        %573 = vmatpush1.bf16.msra.mxu0 %v550
        %574 = vmatprep.subr.bf16.mxu0 %v553
        %575 = vmatpush1.bf16.msra.mxu0 %v552
        %576 = vmatprep.subr.bf16.mxu0 %v555
        %577 = vmatpush1.bf16.msra.mxu0 %v554
        %578 = vmatprep.subr.bf16.mxu0 0
        %579 = vmatpush1.bf16.msra.mxu0 0
        %580 = vmatprep.subr.bf16.mxu0 0
        %581 = vmatpush1.bf16.msra.mxu0 0
        %582 = vmatprep.subr.bf16.mxu0 0
        %583 = vmatpush1.bf16.msra.mxu0 0
        %584 = vmatprep.subr.bf16.mxu0 0
        %585 = vmatpush1.bf16.msra.mxu0 0
        %586 = vmatprep.subr.bf16.mxu0 0
        %587 = vmatpush1.bf16.msra.mxu0 0
        %588 = vmatprep.subr.bf16.mxu0 0
        %589 = vmatpush1.bf16.msra.mxu0 0
        %590 = vmatprep.subr.bf16.mxu0 0
        %591 = vmatpush1.bf16.msra.mxu0 0
        %592 = vmatprep.subr.bf16.mxu0 0
        %593 = vmatpush1.bf16.msra.mxu0 0
        %594 = vmatprep.subr.bf16.mxu0 0
        %595 = vmatpush1.bf16.msra.mxu0 0
        %596 = vmatprep.subr.bf16.mxu0 0
        %597 = vmatpush1.bf16.msra.mxu0 0
        %598 = vmatprep.subr.bf16.mxu0 0
        %599 = vmatpush1.bf16.msra.mxu0 0
        %600 = vmatprep.subr.bf16.mxu0 0
        %601 = vmatpush1.bf16.msra.mxu0 0
        %602 = vmatprep.mubr.bf16.mxu0 0
        %603 = vmatmul.mubr.bf16.gmra.mrb[0].mxu0 %v565
        %v604 = vpop.f32.mrb[0].mxu0
        %v605 = vadd.f32 0.0, %v604
        %v606 = vpop.f32.mrb[0].mxu0
        %v607 = vadd.f32 0.0, %v606
        %v608 = vpop.f32.mrb[0].mxu0
        %v609 = vadd.f32 0.0, %v608
        %v610 = vpop.f32.mrb[0].mxu0
        %v611 = vadd.f32 0.0, %v610
        %612 = vmatprep.mubr.bf16.mxu0 0
        %613 = vmatmul.mubr.bf16.gmra.mrb[0].mxu0 %v568
        %v614 = vpop.f32.mrb[0].mxu0
        %v615 = vadd.f32 0.0, %v614
        %v616 = vpop.f32.mrb[0].mxu0
        %v617 = vadd.f32 0.0, %v616
        %v618 = vpop.f32.mrb[0].mxu0
        %v619 = vadd.f32 0.0, %v618
        %v620 = vpop.f32.mrb[0].mxu0
        %v621 = vadd.f32 0.0, %v620
        %622 = vdwg.mxu0
        %v623 = vpack.c.bf16 %v609, %v605
        %v624 = vpack.c.bf16 %v611, %v607
        %v625 = vpack.c.bf16 %v619, %v615
        %v626 = vpack.c.bf16 %v621, %v617
        %v627 = vlaneseq
        %v628 = vshrl.u32 %v627, 7
        %v629 = vadd.s32 %v628, 8
        %v630 = vlaneseq
        %v631 = vand.u32 %v630, 127
        %vm632 = vcmp.le.s32.totalorder %v631, %v628
        %vm633 = vcmp.le.s32.totalorder %v631, %v629
        %635 = vrot.lane.b32.xlu0 %v623, 64
        %v636 = vpop.permute.xlu0 %635
        %vm637 = vcmask 130048
        %v639 = vsel %vm637, %v623, 0
        %v642 = vsel %vm637, %v636, 0
        %644 = vmatprep.subr.bf16.mxu0 0
        %645 = vmatpush1.bf16.xpose.msra.mxu0 %v642
        %646 = vmatprep.subr.bf16.mxu0 0
        %647 = vmatpush1.bf16.xpose.msra.mxu0 0
        %648 = vmatprep.subr.bf16.mxu0 0
        %649 = vmatpush1.bf16.xpose.msra.mxu0 0
        %650 = vmatprep.subr.bf16.mxu0 0
        %651 = vmatpush1.bf16.xpose.msra.mxu0 0
        %652 = vmatprep.subr.bf16.mxu0 0
        %653 = vmatpush1.bf16.xpose.msra.mxu0 0
        %654 = vmatprep.subr.bf16.mxu0 0
        %655 = vmatpush1.bf16.xpose.msra.mxu0 0
        %656 = vmatprep.subr.bf16.mxu0 0
        %657 = vmatpush1.bf16.xpose.msra.mxu0 0
        %658 = vmatprep.subr.bf16.mxu0 0
        %659 = vmatpush1.bf16.xpose.msra.mxu0 0
        %660 = vmatprep.subr.bf16.mxu0 0
        %661 = vmatpush1.bf16.xpose.msra.mxu0 0
        %662 = vmatprep.subr.bf16.mxu0 0
        %663 = vmatpush1.bf16.xpose.msra.mxu0 0
        %664 = vmatprep.subr.bf16.mxu0 0
        %665 = vmatpush1.bf16.xpose.msra.mxu0 0
        %666 = vmatprep.subr.bf16.mxu0 0
        %667 = vmatpush1.bf16.xpose.msra.mxu0 0
        %668 = vmatprep.subr.bf16.mxu0 0
        %669 = vmatpush1.bf16.xpose.msra.mxu0 0
        %670 = vmatprep.subr.bf16.mxu0 0
        %671 = vmatpush1.bf16.xpose.msra.mxu0 0
        %672 = vmatprep.subr.bf16.mxu0 0
        %673 = vmatpush1.bf16.xpose.msra.mxu0 0
        %674 = vmatprep.subr.bf16.mxu0 0
        %675 = vmatpush1.bf16.xpose.msra.mxu0 0
        %676 = vmatprep.mubr.bf16.mxu0 0
        %677 = vmatmul.mubr.bf16.gmra.mrb[0].mxu0 %v639
        %v678 = vpop.f32.mrb[0].mxu0
        %v679 = vadd.f32 0.0, %v678
        %v680 = vpop.f32.mrb[0].mxu0
        %v681 = vpop.f32.mrb[0].mxu0
        %v682 = vadd.f32 0.0, %v681
        %v683 = vpop.f32.mrb[0].mxu0
        %684 = vdwg.mxu0
        %686 = vrot.lane.b32.xlu0 %v625, 64
        %v687 = vpop.permute.xlu0 %686
        %v689 = vsel %vm637, %v625, 0
        %v692 = vsel %vm637, %v687, 0
        %694 = vmatprep.subr.bf16.mxu0 0
        %695 = vmatpush1.bf16.xpose.msra.mxu0 %v692
        %696 = vmatprep.subr.bf16.mxu0 0
        %697 = vmatpush1.bf16.xpose.msra.mxu0 0
        %698 = vmatprep.subr.bf16.mxu0 0
        %699 = vmatpush1.bf16.xpose.msra.mxu0 0
        %700 = vmatprep.subr.bf16.mxu0 0
        %701 = vmatpush1.bf16.xpose.msra.mxu0 0
        %702 = vmatprep.subr.bf16.mxu0 0
        %703 = vmatpush1.bf16.xpose.msra.mxu0 0
        %704 = vmatprep.subr.bf16.mxu0 0
        %705 = vmatpush1.bf16.xpose.msra.mxu0 0
        %706 = vmatprep.subr.bf16.mxu0 0
        %707 = vmatpush1.bf16.xpose.msra.mxu0 0
        %708 = vmatprep.subr.bf16.mxu0 0
        %709 = vmatpush1.bf16.xpose.msra.mxu0 0
        %710 = vmatprep.subr.bf16.mxu0 0
        %711 = vmatpush1.bf16.xpose.msra.mxu0 0
        %712 = vmatprep.subr.bf16.mxu0 0
        %713 = vmatpush1.bf16.xpose.msra.mxu0 0
        %714 = vmatprep.subr.bf16.mxu0 0
        %715 = vmatpush1.bf16.xpose.msra.mxu0 0
        %716 = vmatprep.subr.bf16.mxu0 0
        %717 = vmatpush1.bf16.xpose.msra.mxu0 0
        %718 = vmatprep.subr.bf16.mxu0 0
        %719 = vmatpush1.bf16.xpose.msra.mxu0 0
        %720 = vmatprep.subr.bf16.mxu0 0
        %721 = vmatpush1.bf16.xpose.msra.mxu0 0
        %722 = vmatprep.subr.bf16.mxu0 0
        %723 = vmatpush1.bf16.xpose.msra.mxu0 0
        %724 = vmatprep.subr.bf16.mxu0 0
        %725 = vmatpush1.bf16.xpose.msra.mxu0 0
        %726 = vmatprep.mubr.bf16.mxu0 0
        %727 = vmatmul.mubr.bf16.gmra.mrb[0].mxu0 %v689
        %v728 = vpop.f32.mrb[0].mxu0
        %v729 = vadd.f32 0.0, %v728
        %v730 = vpop.f32.mrb[0].mxu0
        %v731 = vpop.f32.mrb[0].mxu0
        %v732 = vadd.f32 0.0, %v731
        %v733 = vpop.f32.mrb[0].mxu0
        %734 = vdwg.mxu0
        %v735 = vsel %vm632, 1, 0
        %v736 = vsel %vm633, 1, 0
        %vm737 = vcmp.eq.s32.totalorder %v735, 1
        %vm738 = vcmp.eq.s32.totalorder %v736, 1
        %v739 = vsel %vm737, %v679, -1e+30
        %v740 = vsel %vm738, %v682, -1e+30
        %v741 = vsel %vm737, %v729, -1e+30
        %v742 = vsel %vm738, %v732, -1e+30
        %v743 = vsel %vm637, %v739, -inf
        %744 = vmax.xlane.f32.xlu0 %v743
        %v745 = vpop.xlane.xlu0 %744
        %v746 = vsel %vm637, %v740, -inf
        %747 = vmax.xlane.f32.xlu0 %v746
        %v748 = vpop.xlane.xlu0 %747
        %v749 = vsel %vm637, %v741, -inf
        %750 = vmax.xlane.f32.xlu0 %v749
        %v751 = vpop.xlane.xlu0 %750
        %v752 = vsel %vm637, %v742, -inf
        %753 = vmax.xlane.f32.xlu0 %v752
        %v754 = vpop.xlane.xlu0 %753
        %v755 = vsub.f32 %v739, %v745
        %v756 = vsub.f32 %v740, %v748
        %v757 = vsub.f32 %v741, %v751
        %v758 = vsub.f32 %v742, %v754
        %v759 = vmul.f32 %v755, 1.442695
        %v760 = vpow.pop %v759
        %v761 = vmul.f32 %v756, 1.442695
        %v762 = vpow.pop %v761
        %v763 = vmul.f32 %v757, 1.442695
        %v764 = vpow.pop %v763
        %v765 = vmul.f32 %v758, 1.442695
        %v766 = vpow.pop %v765
        %v767 = vsel %vm637, %v760, 0.0
        %768 = vadd.xlane.f32.xlu0 %v767
        %v769 = vpop.xlane.xlu0 %768
        %v770 = vsel %vm637, %v762, 0.0
        %771 = vadd.xlane.f32.xlu0 %v770
        %v772 = vpop.xlane.xlu0 %771
        %v773 = vsel %vm637, %v764, 0.0
        %774 = vadd.xlane.f32.xlu0 %v773
        %v775 = vpop.xlane.xlu0 %774
        %v776 = vsel %vm637, %v766, 0.0
        %777 = vadd.xlane.f32.xlu0 %v776
        %v778 = vpop.xlane.xlu0 %777
        %v779 = vpack.c.bf16 %v762, %v760
        %v780 = vpack.c.bf16 %v766, %v764
        %v782 = vsel %vm637, %v779, 0
        %784 = vmatprep.subr.bf16.mxu0 0
        %785 = vmatpush1.bf16.msra.mxu0 %v624
        %786 = vmatprep.subr.bf16.mxu0 0
        %787 = vmatpush1.bf16.msra.mxu0 0
        %788 = vmatprep.subr.bf16.mxu0 0
        %789 = vmatpush1.bf16.msra.mxu0 0
        %790 = vmatprep.subr.bf16.mxu0 0
        %791 = vmatpush1.bf16.msra.mxu0 0
        %792 = vmatprep.subr.bf16.mxu0 0
        %793 = vmatpush1.bf16.msra.mxu0 0
        %794 = vmatprep.subr.bf16.mxu0 0
        %795 = vmatpush1.bf16.msra.mxu0 0
        %796 = vmatprep.subr.bf16.mxu0 0
        %797 = vmatpush1.bf16.msra.mxu0 0
        %798 = vmatprep.subr.bf16.mxu0 0
        %799 = vmatpush1.bf16.msra.mxu0 0
        %800 = vmatprep.subr.bf16.mxu0 0
        %801 = vmatpush1.bf16.msra.mxu0 0
        %802 = vmatprep.subr.bf16.mxu0 0
        %803 = vmatpush1.bf16.msra.mxu0 0
        %804 = vmatprep.subr.bf16.mxu0 0
        %805 = vmatpush1.bf16.msra.mxu0 0
        %806 = vmatprep.subr.bf16.mxu0 0
        %807 = vmatpush1.bf16.msra.mxu0 0
        %808 = vmatprep.subr.bf16.mxu0 0
        %809 = vmatpush1.bf16.msra.mxu0 0
        %810 = vmatprep.subr.bf16.mxu0 0
        %811 = vmatpush1.bf16.msra.mxu0 0
        %812 = vmatprep.subr.bf16.mxu0 0
        %813 = vmatpush1.bf16.msra.mxu0 0
        %814 = vmatprep.subr.bf16.mxu0 0
        %815 = vmatpush1.bf16.msra.mxu0 0
        %816 = vmatprep.mubr.bf16.mxu0 0
        %817 = vmatmul.mubr.bf16.gmra.mrb[0].mxu0 %v782
        %v818 = vpop.f32.mrb[0].mxu0
        %v819 = vadd.f32 0.0, %v818
        %v820 = vpop.f32.mrb[0].mxu0
        %v821 = vpop.f32.mrb[0].mxu0
        %v822 = vadd.f32 0.0, %v821
        %v823 = vpop.f32.mrb[0].mxu0
        %824 = vdwg.mxu0
        %v826 = vsel %vm637, %v780, 0
        %828 = vmatprep.subr.bf16.mxu0 0
        %829 = vmatpush1.bf16.msra.mxu0 %v626
        %830 = vmatprep.subr.bf16.mxu0 0
        %831 = vmatpush1.bf16.msra.mxu0 0
        %832 = vmatprep.subr.bf16.mxu0 0
        %833 = vmatpush1.bf16.msra.mxu0 0
        %834 = vmatprep.subr.bf16.mxu0 0
        %835 = vmatpush1.bf16.msra.mxu0 0
        %836 = vmatprep.subr.bf16.mxu0 0
        %837 = vmatpush1.bf16.msra.mxu0 0
        %838 = vmatprep.subr.bf16.mxu0 0
        %839 = vmatpush1.bf16.msra.mxu0 0
        %840 = vmatprep.subr.bf16.mxu0 0
        %841 = vmatpush1.bf16.msra.mxu0 0
        %842 = vmatprep.subr.bf16.mxu0 0
        %843 = vmatpush1.bf16.msra.mxu0 0
        %844 = vmatprep.subr.bf16.mxu0 0
        %845 = vmatpush1.bf16.msra.mxu0 0
        %846 = vmatprep.subr.bf16.mxu0 0
        %847 = vmatpush1.bf16.msra.mxu0 0
        %848 = vmatprep.subr.bf16.mxu0 0
        %849 = vmatpush1.bf16.msra.mxu0 0
        %850 = vmatprep.subr.bf16.mxu0 0
        %851 = vmatpush1.bf16.msra.mxu0 0
        %852 = vmatprep.subr.bf16.mxu0 0
        %853 = vmatpush1.bf16.msra.mxu0 0
        %854 = vmatprep.subr.bf16.mxu0 0
        %855 = vmatpush1.bf16.msra.mxu0 0
        %856 = vmatprep.subr.bf16.mxu0 0
        %857 = vmatpush1.bf16.msra.mxu0 0
        %858 = vmatprep.subr.bf16.mxu0 0
        %859 = vmatpush1.bf16.msra.mxu0 0
        %860 = vmatprep.mubr.bf16.mxu0 0
        %861 = vmatmul.mubr.bf16.gmra.mrb[0].mxu0 %v826
        %v862 = vpop.f32.mrb[0].mxu0
        %v863 = vadd.f32 0.0, %v862
        %v864 = vpop.f32.mrb[0].mxu0
        %v865 = vpop.f32.mrb[0].mxu0
        %v866 = vadd.f32 0.0, %v865
        %v867 = vpop.f32.mrb[0].mxu0
        %868 = vdwg.mxu0
        %v869 = vrcp.pop %v769
        %v870 = vrcp.pop %v772
        %v871 = vrcp.pop %v775
        %v872 = vrcp.pop %v778
        %v873 = vmul.f32 %v819, %v869
        %v874 = vmul.f32 %v822, %v870
        %v875 = vmul.f32 %v863, %v871
        %v876 = vmul.f32 %v866, %v872
        %v877 = vpack.c.bf16 %v874, %v873
        %v878 = vpack.c.bf16 %v876, %v875
        %879 = vrot.lane.b32.xlu0 %v623, 112
        %v880 = vpop.permute.xlu0 %879
        %881 = vrot.lane.b32.xlu0 %v623, 48
        %v882 = vpop.permute.xlu0 %881
        %v884 = vsel %vm637, %v880, 0
        %v887 = vsel %vm637, %v882, 0
        %889 = vmatprep.subr.bf16.mxu0 0
        %890 = vmatpush1.bf16.xpose.msra.mxu0 %v887
        %891 = vmatprep.subr.bf16.mxu0 0
        %892 = vmatpush1.bf16.xpose.msra.mxu0 0
        %893 = vmatprep.subr.bf16.mxu0 0
        %894 = vmatpush1.bf16.xpose.msra.mxu0 0
        %895 = vmatprep.subr.bf16.mxu0 0
        %896 = vmatpush1.bf16.xpose.msra.mxu0 0
        %897 = vmatprep.subr.bf16.mxu0 0
        %898 = vmatpush1.bf16.xpose.msra.mxu0 0
        %899 = vmatprep.subr.bf16.mxu0 0
        %900 = vmatpush1.bf16.xpose.msra.mxu0 0
        %901 = vmatprep.subr.bf16.mxu0 0
        %902 = vmatpush1.bf16.xpose.msra.mxu0 0
        %903 = vmatprep.subr.bf16.mxu0 0
        %904 = vmatpush1.bf16.xpose.msra.mxu0 0
        %905 = vmatprep.subr.bf16.mxu0 0
        %906 = vmatpush1.bf16.xpose.msra.mxu0 0
        %907 = vmatprep.subr.bf16.mxu0 0
        %908 = vmatpush1.bf16.xpose.msra.mxu0 0
        %909 = vmatprep.subr.bf16.mxu0 0
        %910 = vmatpush1.bf16.xpose.msra.mxu0 0
        %911 = vmatprep.subr.bf16.mxu0 0
        %912 = vmatpush1.bf16.xpose.msra.mxu0 0
        %913 = vmatprep.subr.bf16.mxu0 0
        %914 = vmatpush1.bf16.xpose.msra.mxu0 0
        %915 = vmatprep.subr.bf16.mxu0 0
        %916 = vmatpush1.bf16.xpose.msra.mxu0 0
        %917 = vmatprep.subr.bf16.mxu0 0
        %918 = vmatpush1.bf16.xpose.msra.mxu0 0
        %919 = vmatprep.subr.bf16.mxu0 0
        %920 = vmatpush1.bf16.xpose.msra.mxu0 0
        %921 = vmatprep.mubr.bf16.mxu0 0
        %922 = vmatmul.mubr.bf16.gmra.mrb[0].mxu0 %v884
        %v923 = vpop.f32.mrb[0].mxu0
        %v924 = vadd.f32 0.0, %v923
        %v925 = vpop.f32.mrb[0].mxu0
        %v926 = vpop.f32.mrb[0].mxu0
        %v927 = vadd.f32 0.0, %v926
        %v928 = vpop.f32.mrb[0].mxu0
        %929 = vdwg.mxu0
        %930 = vrot.lane.b32.xlu0 %v625, 112
        %v931 = vpop.permute.xlu0 %930
        %932 = vrot.lane.b32.xlu0 %v625, 48
        %v933 = vpop.permute.xlu0 %932
        %v935 = vsel %vm637, %v931, 0
        %v938 = vsel %vm637, %v933, 0
        %940 = vmatprep.subr.bf16.mxu0 0
        %941 = vmatpush1.bf16.xpose.msra.mxu0 %v938
        %942 = vmatprep.subr.bf16.mxu0 0
        %943 = vmatpush1.bf16.xpose.msra.mxu0 0
        %944 = vmatprep.subr.bf16.mxu0 0
        %945 = vmatpush1.bf16.xpose.msra.mxu0 0
        %946 = vmatprep.subr.bf16.mxu0 0
        %947 = vmatpush1.bf16.xpose.msra.mxu0 0
        %948 = vmatprep.subr.bf16.mxu0 0
        %949 = vmatpush1.bf16.xpose.msra.mxu0 0
        %950 = vmatprep.subr.bf16.mxu0 0
        %951 = vmatpush1.bf16.xpose.msra.mxu0 0
        %952 = vmatprep.subr.bf16.mxu0 0
        %953 = vmatpush1.bf16.xpose.msra.mxu0 0
        %954 = vmatprep.subr.bf16.mxu0 0
        %955 = vmatpush1.bf16.xpose.msra.mxu0 0
        %956 = vmatprep.subr.bf16.mxu0 0
        %957 = vmatpush1.bf16.xpose.msra.mxu0 0
        %958 = vmatprep.subr.bf16.mxu0 0
        %959 = vmatpush1.bf16.xpose.msra.mxu0 0
        %960 = vmatprep.subr.bf16.mxu0 0
        %961 = vmatpush1.bf16.xpose.msra.mxu0 0
        %962 = vmatprep.subr.bf16.mxu0 0
        %963 = vmatpush1.bf16.xpose.msra.mxu0 0
        %964 = vmatprep.subr.bf16.mxu0 0
        %965 = vmatpush1.bf16.xpose.msra.mxu0 0
        %966 = vmatprep.subr.bf16.mxu0 0
        %967 = vmatpush1.bf16.xpose.msra.mxu0 0
        %968 = vmatprep.subr.bf16.mxu0 0
        %969 = vmatpush1.bf16.xpose.msra.mxu0 0
        %970 = vmatprep.subr.bf16.mxu0 0
        %971 = vmatpush1.bf16.xpose.msra.mxu0 0
        %972 = vmatprep.mubr.bf16.mxu0 0
        %973 = vmatmul.mubr.bf16.gmra.mrb[0].mxu0 %v935
        %v974 = vpop.f32.mrb[0].mxu0
        %v975 = vadd.f32 0.0, %v974
        %v976 = vpop.f32.mrb[0].mxu0
        %v977 = vpop.f32.mrb[0].mxu0
        %v978 = vadd.f32 0.0, %v977
        %v979 = vpop.f32.mrb[0].mxu0
        %980 = vdwg.mxu0
        %v981 = vsel %vm737, %v924, -1e+30
        %v982 = vsel %vm738, %v927, -1e+30
        %v983 = vsel %vm737, %v975, -1e+30
        %v984 = vsel %vm738, %v978, -1e+30
        %v985 = vsel %vm637, %v981, -inf
        %986 = vmax.xlane.f32.xlu0 %v985
        %v987 = vpop.xlane.xlu0 %986
        %v988 = vsel %vm637, %v982, -inf
        %989 = vmax.xlane.f32.xlu0 %v988
        %v990 = vpop.xlane.xlu0 %989
        %v991 = vsel %vm637, %v983, -inf
        %992 = vmax.xlane.f32.xlu0 %v991
        %v993 = vpop.xlane.xlu0 %992
        %v994 = vsel %vm637, %v984, -inf
        %995 = vmax.xlane.f32.xlu0 %v994
        %v996 = vpop.xlane.xlu0 %995
        %v997 = vsub.f32 %v981, %v987
        %v998 = vsub.f32 %v982, %v990
        %v999 = vsub.f32 %v983, %v993
        %v1000 = vsub.f32 %v984, %v996
        %v1001 = vmul.f32 %v997, 1.442695
        %v1002 = vpow.pop %v1001
        %v1003 = vmul.f32 %v998, 1.442695
        %v1004 = vpow.pop %v1003
        %v1005 = vmul.f32 %v999, 1.442695
        %v1006 = vpow.pop %v1005
        %v1007 = vmul.f32 %v1000, 1.442695
        %v1008 = vpow.pop %v1007
        %v1009 = vsel %vm637, %v1002, 0.0
        %1010 = vadd.xlane.f32.xlu0 %v1009
        %v1011 = vpop.xlane.xlu0 %1010
        %v1012 = vsel %vm637, %v1004, 0.0
        %1013 = vadd.xlane.f32.xlu0 %v1012
        %v1014 = vpop.xlane.xlu0 %1013
        %v1015 = vsel %vm637, %v1006, 0.0
        %1016 = vadd.xlane.f32.xlu0 %v1015
        %v1017 = vpop.xlane.xlu0 %1016
        %v1018 = vsel %vm637, %v1008, 0.0
        %1019 = vadd.xlane.f32.xlu0 %v1018
        %v1020 = vpop.xlane.xlu0 %1019
        %v1021 = vpack.c.bf16 %v1004, %v1002
        %v1022 = vpack.c.bf16 %v1008, %v1006
        %1024 = vrot.lane.b32.xlu0 %v624, 112
        %v1025 = vpop.permute.xlu0 %1024
        %v1028 = vsel %vm637, %v1021, 0
        %1030 = vmatprep.subr.bf16.mxu0 0
        %1031 = vmatpush1.bf16.msra.mxu0 %v1025
        %1032 = vmatprep.subr.bf16.mxu0 0
        %1033 = vmatpush1.bf16.msra.mxu0 0
        %1034 = vmatprep.subr.bf16.mxu0 0
        %1035 = vmatpush1.bf16.msra.mxu0 0
        %1036 = vmatprep.subr.bf16.mxu0 0
        %1037 = vmatpush1.bf16.msra.mxu0 0
        %1038 = vmatprep.subr.bf16.mxu0 0
        %1039 = vmatpush1.bf16.msra.mxu0 0
        %1040 = vmatprep.subr.bf16.mxu0 0
        %1041 = vmatpush1.bf16.msra.mxu0 0
        %1042 = vmatprep.subr.bf16.mxu0 0
        %1043 = vmatpush1.bf16.msra.mxu0 0
        %1044 = vmatprep.subr.bf16.mxu0 0
        %1045 = vmatpush1.bf16.msra.mxu0 0
        %1046 = vmatprep.subr.bf16.mxu0 0
        %1047 = vmatpush1.bf16.msra.mxu0 0
        %1048 = vmatprep.subr.bf16.mxu0 0
        %1049 = vmatpush1.bf16.msra.mxu0 0
        %1050 = vmatprep.subr.bf16.mxu0 0
        %1051 = vmatpush1.bf16.msra.mxu0 0
        %1052 = vmatprep.subr.bf16.mxu0 0
        %1053 = vmatpush1.bf16.msra.mxu0 0
        %1054 = vmatprep.subr.bf16.mxu0 0
        %1055 = vmatpush1.bf16.msra.mxu0 0
        %1056 = vmatprep.subr.bf16.mxu0 0
        %1057 = vmatpush1.bf16.msra.mxu0 0
        %1058 = vmatprep.subr.bf16.mxu0 0
        %1059 = vmatpush1.bf16.msra.mxu0 0
        %1060 = vmatprep.subr.bf16.mxu0 0
        %1061 = vmatpush1.bf16.msra.mxu0 0
        %1062 = vmatprep.mubr.bf16.mxu0 0
        %1063 = vmatmul.mubr.bf16.gmra.mrb[0].mxu0 %v1028
        %v1064 = vpop.f32.mrb[0].mxu0
        %v1065 = vadd.f32 0.0, %v1064
        %v1066 = vpop.f32.mrb[0].mxu0
        %v1067 = vpop.f32.mrb[0].mxu0
        %v1068 = vadd.f32 0.0, %v1067
        %v1069 = vpop.f32.mrb[0].mxu0
        %1070 = vdwg.mxu0
        %1072 = vrot.lane.b32.xlu0 %v626, 112
        %v1073 = vpop.permute.xlu0 %1072
        %v1076 = vsel %vm637, %v1022, 0
        %1078 = vmatprep.subr.bf16.mxu0 0
        %1079 = vmatpush1.bf16.msra.mxu0 %v1073
        %1080 = vmatprep.subr.bf16.mxu0 0
        %1081 = vmatpush1.bf16.msra.mxu0 0
        %1082 = vmatprep.subr.bf16.mxu0 0
        %1083 = vmatpush1.bf16.msra.mxu0 0
        %1084 = vmatprep.subr.bf16.mxu0 0
        %1085 = vmatpush1.bf16.msra.mxu0 0
        %1086 = vmatprep.subr.bf16.mxu0 0
        %1087 = vmatpush1.bf16.msra.mxu0 0
        %1088 = vmatprep.subr.bf16.mxu0 0
        %1089 = vmatpush1.bf16.msra.mxu0 0
        %1090 = vmatprep.subr.bf16.mxu0 0
        %1091 = vmatpush1.bf16.msra.mxu0 0
        %1092 = vmatprep.subr.bf16.mxu0 0
        %1093 = vmatpush1.bf16.msra.mxu0 0
        %1094 = vmatprep.subr.bf16.mxu0 0
        %1095 = vmatpush1.bf16.msra.mxu0 0
        %1096 = vmatprep.subr.bf16.mxu0 0
        %1097 = vmatpush1.bf16.msra.mxu0 0
        %1098 = vmatprep.subr.bf16.mxu0 0
        %1099 = vmatpush1.bf16.msra.mxu0 0
        %1100 = vmatprep.subr.bf16.mxu0 0
        %1101 = vmatpush1.bf16.msra.mxu0 0
        %1102 = vmatprep.subr.bf16.mxu0 0
        %1103 = vmatpush1.bf16.msra.mxu0 0
        %1104 = vmatprep.subr.bf16.mxu0 0
        %1105 = vmatpush1.bf16.msra.mxu0 0
        %1106 = vmatprep.subr.bf16.mxu0 0
        %1107 = vmatpush1.bf16.msra.mxu0 0
        %1108 = vmatprep.subr.bf16.mxu0 0
        %1109 = vmatpush1.bf16.msra.mxu0 0
        %1110 = vmatprep.mubr.bf16.mxu0 0
        %1111 = vmatmul.mubr.bf16.gmra.mrb[0].mxu0 %v1076
        %v1112 = vpop.f32.mrb[0].mxu0
        %v1113 = vadd.f32 0.0, %v1112
        %v1114 = vpop.f32.mrb[0].mxu0
        %v1115 = vpop.f32.mrb[0].mxu0
        %v1116 = vadd.f32 0.0, %v1115
        %v1117 = vpop.f32.mrb[0].mxu0
        %1118 = vdwg.mxu0
        %v1119 = vrcp.pop %v1011
        %v1120 = vrcp.pop %v1014
        %v1121 = vrcp.pop %v1017
        %v1122 = vrcp.pop %v1020
        %v1123 = vmul.f32 %v1065, %v1119
        %v1124 = vmul.f32 %v1068, %v1120
        %v1125 = vmul.f32 %v1113, %v1121
        %v1126 = vmul.f32 %v1116, %v1122
        %v1127 = vpack.c.bf16 %v1124, %v1123
        %v1128 = vpack.c.bf16 %v1126, %v1125
        %1129 = vrot.lane.b32.xlu0 %v623, 96
        %v1130 = vpop.permute.xlu0 %1129
        %1131 = vrot.lane.b32.xlu0 %v623, 32
        %v1132 = vpop.permute.xlu0 %1131
        %v1134 = vsel %vm637, %v1130, 0
        %v1137 = vsel %vm637, %v1132, 0
        %1139 = vmatprep.subr.bf16.mxu0 0
        %1140 = vmatpush1.bf16.xpose.msra.mxu0 %v1137
        %1141 = vmatprep.subr.bf16.mxu0 0
        %1142 = vmatpush1.bf16.xpose.msra.mxu0 0
        %1143 = vmatprep.subr.bf16.mxu0 0
        %1144 = vmatpush1.bf16.xpose.msra.mxu0 0
        %1145 = vmatprep.subr.bf16.mxu0 0
        %1146 = vmatpush1.bf16.xpose.msra.mxu0 0
        %1147 = vmatprep.subr.bf16.mxu0 0
        %1148 = vmatpush1.bf16.xpose.msra.mxu0 0
        %1149 = vmatprep.subr.bf16.mxu0 0
        %1150 = vmatpush1.bf16.xpose.msra.mxu0 0
        %1151 = vmatprep.subr.bf16.mxu0 0
        %1152 = vmatpush1.bf16.xpose.msra.mxu0 0
        %1153 = vmatprep.subr.bf16.mxu0 0
        %1154 = vmatpush1.bf16.xpose.msra.mxu0 0
        %1155 = vmatprep.subr.bf16.mxu0 0
        %1156 = vmatpush1.bf16.xpose.msra.mxu0 0
        %1157 = vmatprep.subr.bf16.mxu0 0
        %1158 = vmatpush1.bf16.xpose.msra.mxu0 0
        %1159 = vmatprep.subr.bf16.mxu0 0
        %1160 = vmatpush1.bf16.xpose.msra.mxu0 0
        %1161 = vmatprep.subr.bf16.mxu0 0
        %1162 = vmatpush1.bf16.xpose.msra.mxu0 0
        %1163 = vmatprep.subr.bf16.mxu0 0
        %1164 = vmatpush1.bf16.xpose.msra.mxu0 0
        %1165 = vmatprep.subr.bf16.mxu0 0
        %1166 = vmatpush1.bf16.xpose.msra.mxu0 0
        %1167 = vmatprep.subr.bf16.mxu0 0
        %1168 = vmatpush1.bf16.xpose.msra.mxu0 0
        %1169 = vmatprep.subr.bf16.mxu0 0
        %1170 = vmatpush1.bf16.xpose.msra.mxu0 0
        %1171 = vmatprep.mubr.bf16.mxu0 0
        %1172 = vmatmul.mubr.bf16.gmra.mrb[0].mxu0 %v1134
        %v1173 = vpop.f32.mrb[0].mxu0
        %v1174 = vadd.f32 0.0, %v1173
        %v1175 = vpop.f32.mrb[0].mxu0
        %v1176 = vpop.f32.mrb[0].mxu0
        %v1177 = vadd.f32 0.0, %v1176
        %v1178 = vpop.f32.mrb[0].mxu0
        %1179 = vdwg.mxu0
        %1180 = vrot.lane.b32.xlu0 %v625, 96
        %v1181 = vpop.permute.xlu0 %1180
        %1182 = vrot.lane.b32.xlu0 %v625, 32
        %v1183 = vpop.permute.xlu0 %1182
        %v1185 = vsel %vm637, %v1181, 0
        %v1188 = vsel %vm637, %v1183, 0
        %1190 = vmatprep.subr.bf16.mxu0 0
        %1191 = vmatpush1.bf16.xpose.msra.mxu0 %v1188
        %1192 = vmatprep.subr.bf16.mxu0 0
        %1193 = vmatpush1.bf16.xpose.msra.mxu0 0
        %1194 = vmatprep.subr.bf16.mxu0 0
        %1195 = vmatpush1.bf16.xpose.msra.mxu0 0
        %1196 = vmatprep.subr.bf16.mxu0 0
        %1197 = vmatpush1.bf16.xpose.msra.mxu0 0
        %1198 = vmatprep.subr.bf16.mxu0 0
        %1199 = vmatpush1.bf16.xpose.msra.mxu0 0
        %1200 = vmatprep.subr.bf16.mxu0 0
        %1201 = vmatpush1.bf16.xpose.msra.mxu0 0
        %1202 = vmatprep.subr.bf16.mxu0 0
        %1203 = vmatpush1.bf16.xpose.msra.mxu0 0
        %1204 = vmatprep.subr.bf16.mxu0 0
        %1205 = vmatpush1.bf16.xpose.msra.mxu0 0
        %1206 = vmatprep.subr.bf16.mxu0 0
        %1207 = vmatpush1.bf16.xpose.msra.mxu0 0
        %1208 = vmatprep.subr.bf16.mxu0 0
        %1209 = vmatpush1.bf16.xpose.msra.mxu0 0
        %1210 = vmatprep.subr.bf16.mxu0 0
        %1211 = vmatpush1.bf16.xpose.msra.mxu0 0
        %1212 = vmatprep.subr.bf16.mxu0 0
        %1213 = vmatpush1.bf16.xpose.msra.mxu0 0
        %1214 = vmatprep.subr.bf16.mxu0 0
        %1215 = vmatpush1.bf16.xpose.msra.mxu0 0
        %1216 = vmatprep.subr.bf16.mxu0 0
        %1217 = vmatpush1.bf16.xpose.msra.mxu0 0
        %1218 = vmatprep.subr.bf16.mxu0 0
        %1219 = vmatpush1.bf16.xpose.msra.mxu0 0
        %1220 = vmatprep.subr.bf16.mxu0 0
        %1221 = vmatpush1.bf16.xpose.msra.mxu0 0
        %1222 = vmatprep.mubr.bf16.mxu0 0
        %1223 = vmatmul.mubr.bf16.gmra.mrb[0].mxu0 %v1185
        %v1224 = vpop.f32.mrb[0].mxu0
        %v1225 = vadd.f32 0.0, %v1224
        %v1226 = vpop.f32.mrb[0].mxu0
        %v1227 = vpop.f32.mrb[0].mxu0
        %v1228 = vadd.f32 0.0, %v1227
        %v1229 = vpop.f32.mrb[0].mxu0
        %1230 = vdwg.mxu0
        %v1231 = vsel %vm737, %v1174, -1e+30
        %v1232 = vsel %vm738, %v1177, -1e+30
        %v1233 = vsel %vm737, %v1225, -1e+30
        %v1234 = vsel %vm738, %v1228, -1e+30
        %v1235 = vsel %vm637, %v1231, -inf
        %1236 = vmax.xlane.f32.xlu0 %v1235
        %v1237 = vpop.xlane.xlu0 %1236
        %v1238 = vsel %vm637, %v1232, -inf
        %1239 = vmax.xlane.f32.xlu0 %v1238
        %v1240 = vpop.xlane.xlu0 %1239
        %v1241 = vsel %vm637, %v1233, -inf
        %1242 = vmax.xlane.f32.xlu0 %v1241
        %v1243 = vpop.xlane.xlu0 %1242
        %v1244 = vsel %vm637, %v1234, -inf
        %1245 = vmax.xlane.f32.xlu0 %v1244
        %v1246 = vpop.xlane.xlu0 %1245
        %v1247 = vsub.f32 %v1231, %v1237
        %v1248 = vsub.f32 %v1232, %v1240
        %v1249 = vsub.f32 %v1233, %v1243
        %v1250 = vsub.f32 %v1234, %v1246
        %v1251 = vmul.f32 %v1247, 1.442695
        %v1252 = vpow.pop %v1251
        %v1253 = vmul.f32 %v1248, 1.442695
        %v1254 = vpow.pop %v1253
        %v1255 = vmul.f32 %v1249, 1.442695
        %v1256 = vpow.pop %v1255
        %v1257 = vmul.f32 %v1250, 1.442695
        %v1258 = vpow.pop %v1257
        %v1259 = vsel %vm637, %v1252, 0.0
        %1260 = vadd.xlane.f32.xlu0 %v1259
        %v1261 = vpop.xlane.xlu0 %1260
        %v1262 = vsel %vm637, %v1254, 0.0
        %1263 = vadd.xlane.f32.xlu0 %v1262
        %v1264 = vpop.xlane.xlu0 %1263
        %v1265 = vsel %vm637, %v1256, 0.0
        %1266 = vadd.xlane.f32.xlu0 %v1265
        %v1267 = vpop.xlane.xlu0 %1266
        %v1268 = vsel %vm637, %v1258, 0.0
        %1269 = vadd.xlane.f32.xlu0 %v1268
        %v1270 = vpop.xlane.xlu0 %1269
        %v1271 = vpack.c.bf16 %v1254, %v1252
        %v1272 = vpack.c.bf16 %v1258, %v1256
        %1273 = vrot.lane.b32.xlu0 %v624, 96
        %v1274 = vpop.permute.xlu0 %1273
        %v1277 = vsel %vm637, %v1271, 0
        %1279 = vmatprep.subr.bf16.mxu0 0
        %1280 = vmatpush1.bf16.msra.mxu0 %v1274
        %1281 = vmatprep.subr.bf16.mxu0 0
        %1282 = vmatpush1.bf16.msra.mxu0 0
        %1283 = vmatprep.subr.bf16.mxu0 0
        %1284 = vmatpush1.bf16.msra.mxu0 0
        %1285 = vmatprep.subr.bf16.mxu0 0
        %1286 = vmatpush1.bf16.msra.mxu0 0
        %1287 = vmatprep.subr.bf16.mxu0 0
        %1288 = vmatpush1.bf16.msra.mxu0 0
        %1289 = vmatprep.subr.bf16.mxu0 0
        %1290 = vmatpush1.bf16.msra.mxu0 0
        %1291 = vmatprep.subr.bf16.mxu0 0
        %1292 = vmatpush1.bf16.msra.mxu0 0
        %1293 = vmatprep.subr.bf16.mxu0 0
        %1294 = vmatpush1.bf16.msra.mxu0 0
        %1295 = vmatprep.subr.bf16.mxu0 0
        %1296 = vmatpush1.bf16.msra.mxu0 0
        %1297 = vmatprep.subr.bf16.mxu0 0
        %1298 = vmatpush1.bf16.msra.mxu0 0
        %1299 = vmatprep.subr.bf16.mxu0 0
        %1300 = vmatpush1.bf16.msra.mxu0 0
        %1301 = vmatprep.subr.bf16.mxu0 0
        %1302 = vmatpush1.bf16.msra.mxu0 0
        %1303 = vmatprep.subr.bf16.mxu0 0
        %1304 = vmatpush1.bf16.msra.mxu0 0
        %1305 = vmatprep.subr.bf16.mxu0 0
        %1306 = vmatpush1.bf16.msra.mxu0 0
        %1307 = vmatprep.subr.bf16.mxu0 0
        %1308 = vmatpush1.bf16.msra.mxu0 0
        %1309 = vmatprep.subr.bf16.mxu0 0
        %1310 = vmatpush1.bf16.msra.mxu0 0
        %1311 = vmatprep.mubr.bf16.mxu0 0
        %1312 = vmatmul.mubr.bf16.gmra.mrb[0].mxu0 %v1277
        %v1313 = vpop.f32.mrb[0].mxu0
        %v1314 = vadd.f32 0.0, %v1313
        %v1315 = vpop.f32.mrb[0].mxu0
        %v1316 = vpop.f32.mrb[0].mxu0
        %v1317 = vadd.f32 0.0, %v1316
        %v1318 = vpop.f32.mrb[0].mxu0
        %1319 = vdwg.mxu0
        %1320 = vrot.lane.b32.xlu0 %v626, 96
        %v1321 = vpop.permute.xlu0 %1320
        %v1324 = vsel %vm637, %v1272, 0
        %1326 = vmatprep.subr.bf16.mxu0 0
        %1327 = vmatpush1.bf16.msra.mxu0 %v1321
        %1328 = vmatprep.subr.bf16.mxu0 0
        %1329 = vmatpush1.bf16.msra.mxu0 0
        %1330 = vmatprep.subr.bf16.mxu0 0
        %1331 = vmatpush1.bf16.msra.mxu0 0
        %1332 = vmatprep.subr.bf16.mxu0 0
        %1333 = vmatpush1.bf16.msra.mxu0 0
        %1334 = vmatprep.subr.bf16.mxu0 0
        %1335 = vmatpush1.bf16.msra.mxu0 0
        %1336 = vmatprep.subr.bf16.mxu0 0
        %1337 = vmatpush1.bf16.msra.mxu0 0
        %1338 = vmatprep.subr.bf16.mxu0 0
        %1339 = vmatpush1.bf16.msra.mxu0 0
        %1340 = vmatprep.subr.bf16.mxu0 0
        %1341 = vmatpush1.bf16.msra.mxu0 0
        %1342 = vmatprep.subr.bf16.mxu0 0
        %1343 = vmatpush1.bf16.msra.mxu0 0
        %1344 = vmatprep.subr.bf16.mxu0 0
        %1345 = vmatpush1.bf16.msra.mxu0 0
        %1346 = vmatprep.subr.bf16.mxu0 0
        %1347 = vmatpush1.bf16.msra.mxu0 0
        %1348 = vmatprep.subr.bf16.mxu0 0
        %1349 = vmatpush1.bf16.msra.mxu0 0
        %1350 = vmatprep.subr.bf16.mxu0 0
        %1351 = vmatpush1.bf16.msra.mxu0 0
        %1352 = vmatprep.subr.bf16.mxu0 0
        %1353 = vmatpush1.bf16.msra.mxu0 0
        %1354 = vmatprep.subr.bf16.mxu0 0
        %1355 = vmatpush1.bf16.msra.mxu0 0
        %1356 = vmatprep.subr.bf16.mxu0 0
        %1357 = vmatpush1.bf16.msra.mxu0 0
        %1358 = vmatprep.mubr.bf16.mxu0 0
        %1359 = vmatmul.mubr.bf16.gmra.mrb[0].mxu0 %v1324
        %v1360 = vpop.f32.mrb[0].mxu0
        %v1361 = vadd.f32 0.0, %v1360
        %v1362 = vpop.f32.mrb[0].mxu0
        %v1363 = vpop.f32.mrb[0].mxu0
        %v1364 = vadd.f32 0.0, %v1363
        %v1365 = vpop.f32.mrb[0].mxu0
        %1366 = vdwg.mxu0
        %v1367 = vrcp.pop %v1261
        %v1368 = vrcp.pop %v1264
        %v1369 = vrcp.pop %v1267
        %v1370 = vrcp.pop %v1270
        %v1371 = vmul.f32 %v1314, %v1367
        %v1372 = vmul.f32 %v1317, %v1368
        %v1373 = vmul.f32 %v1361, %v1369
        %v1374 = vmul.f32 %v1364, %v1370
        %v1375 = vpack.c.bf16 %v1372, %v1371
        %v1376 = vpack.c.bf16 %v1374, %v1373
        %1377 = vrot.lane.b32.xlu0 %v623, 80
        %v1378 = vpop.permute.xlu0 %1377
        %1379 = vrot.lane.b32.xlu0 %v623, 16
        %v1380 = vpop.permute.xlu0 %1379
        %v1382 = vsel %vm637, %v1378, 0
        %v1385 = vsel %vm637, %v1380, 0
        %1387 = vmatprep.subr.bf16.mxu0 0
        %1388 = vmatpush1.bf16.xpose.msra.mxu0 %v1385
        %1389 = vmatprep.subr.bf16.mxu0 0
        %1390 = vmatpush1.bf16.xpose.msra.mxu0 0
        %1391 = vmatprep.subr.bf16.mxu0 0
        %1392 = vmatpush1.bf16.xpose.msra.mxu0 0
        %1393 = vmatprep.subr.bf16.mxu0 0
        %1394 = vmatpush1.bf16.xpose.msra.mxu0 0
        %1395 = vmatprep.subr.bf16.mxu0 0
        %1396 = vmatpush1.bf16.xpose.msra.mxu0 0
        %1397 = vmatprep.subr.bf16.mxu0 0
        %1398 = vmatpush1.bf16.xpose.msra.mxu0 0
        %1399 = vmatprep.subr.bf16.mxu0 0
        %1400 = vmatpush1.bf16.xpose.msra.mxu0 0
        %1401 = vmatprep.subr.bf16.mxu0 0
        %1402 = vmatpush1.bf16.xpose.msra.mxu0 0
        %1403 = vmatprep.subr.bf16.mxu0 0
        %1404 = vmatpush1.bf16.xpose.msra.mxu0 0
        %1405 = vmatprep.subr.bf16.mxu0 0
        %1406 = vmatpush1.bf16.xpose.msra.mxu0 0
        %1407 = vmatprep.subr.bf16.mxu0 0
        %1408 = vmatpush1.bf16.xpose.msra.mxu0 0
        %1409 = vmatprep.subr.bf16.mxu0 0
        %1410 = vmatpush1.bf16.xpose.msra.mxu0 0
        %1411 = vmatprep.subr.bf16.mxu0 0
        %1412 = vmatpush1.bf16.xpose.msra.mxu0 0
        %1413 = vmatprep.subr.bf16.mxu0 0
        %1414 = vmatpush1.bf16.xpose.msra.mxu0 0
        %1415 = vmatprep.subr.bf16.mxu0 0
        %1416 = vmatpush1.bf16.xpose.msra.mxu0 0
        %1417 = vmatprep.subr.bf16.mxu0 0
        %1418 = vmatpush1.bf16.xpose.msra.mxu0 0
        %1419 = vmatprep.mubr.bf16.mxu0 0
        %1420 = vmatmul.mubr.bf16.gmra.mrb[0].mxu0 %v1382
        %v1421 = vpop.f32.mrb[0].mxu0
        %v1422 = vadd.f32 0.0, %v1421
        %v1423 = vpop.f32.mrb[0].mxu0
        %v1424 = vpop.f32.mrb[0].mxu0
        %v1425 = vadd.f32 0.0, %v1424
        %v1426 = vpop.f32.mrb[0].mxu0
        %1427 = vdwg.mxu0
        %1428 = vrot.lane.b32.xlu0 %v625, 80
        %v1429 = vpop.permute.xlu0 %1428
        %1430 = vrot.lane.b32.xlu0 %v625, 16
        %v1431 = vpop.permute.xlu0 %1430
        %v1433 = vsel %vm637, %v1429, 0
        %v1436 = vsel %vm637, %v1431, 0
        %1438 = vmatprep.subr.bf16.mxu0 0
        %1439 = vmatpush1.bf16.xpose.msra.mxu0 %v1436
        %1440 = vmatprep.subr.bf16.mxu0 0
        %1441 = vmatpush1.bf16.xpose.msra.mxu0 0
        %1442 = vmatprep.subr.bf16.mxu0 0
        %1443 = vmatpush1.bf16.xpose.msra.mxu0 0
        %1444 = vmatprep.subr.bf16.mxu0 0
        %1445 = vmatpush1.bf16.xpose.msra.mxu0 0
        %1446 = vmatprep.subr.bf16.mxu0 0
        %1447 = vmatpush1.bf16.xpose.msra.mxu0 0
        %1448 = vmatprep.subr.bf16.mxu0 0
        %1449 = vmatpush1.bf16.xpose.msra.mxu0 0
        %1450 = vmatprep.subr.bf16.mxu0 0
        %1451 = vmatpush1.bf16.xpose.msra.mxu0 0
        %1452 = vmatprep.subr.bf16.mxu0 0
        %1453 = vmatpush1.bf16.xpose.msra.mxu0 0
        %1454 = vmatprep.subr.bf16.mxu0 0
        %1455 = vmatpush1.bf16.xpose.msra.mxu0 0
        %1456 = vmatprep.subr.bf16.mxu0 0
        %1457 = vmatpush1.bf16.xpose.msra.mxu0 0
        %1458 = vmatprep.subr.bf16.mxu0 0
        %1459 = vmatpush1.bf16.xpose.msra.mxu0 0
        %1460 = vmatprep.subr.bf16.mxu0 0
        %1461 = vmatpush1.bf16.xpose.msra.mxu0 0
        %1462 = vmatprep.subr.bf16.mxu0 0
        %1463 = vmatpush1.bf16.xpose.msra.mxu0 0
        %1464 = vmatprep.subr.bf16.mxu0 0
        %1465 = vmatpush1.bf16.xpose.msra.mxu0 0
        %1466 = vmatprep.subr.bf16.mxu0 0
        %1467 = vmatpush1.bf16.xpose.msra.mxu0 0
        %1468 = vmatprep.subr.bf16.mxu0 0
        %1469 = vmatpush1.bf16.xpose.msra.mxu0 0
        %1470 = vmatprep.mubr.bf16.mxu0 0
        %1471 = vmatmul.mubr.bf16.gmra.mrb[0].mxu0 %v1433
        %v1472 = vpop.f32.mrb[0].mxu0
        %v1473 = vadd.f32 0.0, %v1472
        %v1474 = vpop.f32.mrb[0].mxu0
        %v1475 = vpop.f32.mrb[0].mxu0
        %v1476 = vadd.f32 0.0, %v1475
        %v1477 = vpop.f32.mrb[0].mxu0
        %1478 = vdwg.mxu0
        %v1479 = vsel %vm737, %v1422, -1e+30
        %v1480 = vsel %vm738, %v1425, -1e+30
        %v1481 = vsel %vm737, %v1473, -1e+30
        %v1482 = vsel %vm738, %v1476, -1e+30
        %v1483 = vsel %vm637, %v1479, -inf
        %1484 = vmax.xlane.f32.xlu0 %v1483
        %v1485 = vpop.xlane.xlu0 %1484
        %v1486 = vsel %vm637, %v1480, -inf
        %1487 = vmax.xlane.f32.xlu0 %v1486
        %v1488 = vpop.xlane.xlu0 %1487
        %v1489 = vsel %vm637, %v1481, -inf
        %1490 = vmax.xlane.f32.xlu0 %v1489
        %v1491 = vpop.xlane.xlu0 %1490
        %v1492 = vsel %vm637, %v1482, -inf
        %1493 = vmax.xlane.f32.xlu0 %v1492
        %v1494 = vpop.xlane.xlu0 %1493
        %v1495 = vsub.f32 %v1479, %v1485
        %v1496 = vsub.f32 %v1480, %v1488
        %v1497 = vsub.f32 %v1481, %v1491
        %v1498 = vsub.f32 %v1482, %v1494
        %v1499 = vmul.f32 %v1495, 1.442695
        %v1500 = vpow.pop %v1499
        %v1501 = vmul.f32 %v1496, 1.442695
        %v1502 = vpow.pop %v1501
        %v1503 = vmul.f32 %v1497, 1.442695
        %v1504 = vpow.pop %v1503
        %v1505 = vmul.f32 %v1498, 1.442695
        %v1506 = vpow.pop %v1505
        %v1507 = vsel %vm637, %v1500, 0.0
        %1508 = vadd.xlane.f32.xlu0 %v1507
        %v1509 = vpop.xlane.xlu0 %1508
        %v1510 = vsel %vm637, %v1502, 0.0
        %1511 = vadd.xlane.f32.xlu0 %v1510
        %v1512 = vpop.xlane.xlu0 %1511
        %v1513 = vsel %vm637, %v1504, 0.0
        %1514 = vadd.xlane.f32.xlu0 %v1513
        %v1515 = vpop.xlane.xlu0 %1514
        %v1516 = vsel %vm637, %v1506, 0.0
        %1517 = vadd.xlane.f32.xlu0 %v1516
        %v1518 = vpop.xlane.xlu0 %1517
        %v1519 = vpack.c.bf16 %v1502, %v1500
        %v1520 = vpack.c.bf16 %v1506, %v1504
        %1521 = vrot.lane.b32.xlu0 %v624, 80
        %v1522 = vpop.permute.xlu0 %1521
        %v1525 = vsel %vm637, %v1519, 0
        %1527 = vmatprep.subr.bf16.mxu0 0
        %1528 = vmatpush1.bf16.msra.mxu0 %v1522
        %1529 = vmatprep.subr.bf16.mxu0 0
        %1530 = vmatpush1.bf16.msra.mxu0 0
        %1531 = vmatprep.subr.bf16.mxu0 0
        %1532 = vmatpush1.bf16.msra.mxu0 0
        %1533 = vmatprep.subr.bf16.mxu0 0
        %1534 = vmatpush1.bf16.msra.mxu0 0
        %1535 = vmatprep.subr.bf16.mxu0 0
        %1536 = vmatpush1.bf16.msra.mxu0 0
        %1537 = vmatprep.subr.bf16.mxu0 0
        %1538 = vmatpush1.bf16.msra.mxu0 0
        %1539 = vmatprep.subr.bf16.mxu0 0
        %1540 = vmatpush1.bf16.msra.mxu0 0
        %1541 = vmatprep.subr.bf16.mxu0 0
        %1542 = vmatpush1.bf16.msra.mxu0 0
        %1543 = vmatprep.subr.bf16.mxu0 0
        %1544 = vmatpush1.bf16.msra.mxu0 0
        %1545 = vmatprep.subr.bf16.mxu0 0
        %1546 = vmatpush1.bf16.msra.mxu0 0
        %1547 = vmatprep.subr.bf16.mxu0 0
        %1548 = vmatpush1.bf16.msra.mxu0 0
        %1549 = vmatprep.subr.bf16.mxu0 0
        %1550 = vmatpush1.bf16.msra.mxu0 0
        %1551 = vmatprep.subr.bf16.mxu0 0
        %1552 = vmatpush1.bf16.msra.mxu0 0
        %1553 = vmatprep.subr.bf16.mxu0 0
        %1554 = vmatpush1.bf16.msra.mxu0 0
        %1555 = vmatprep.subr.bf16.mxu0 0
        %1556 = vmatpush1.bf16.msra.mxu0 0
        %1557 = vmatprep.subr.bf16.mxu0 0
        %1558 = vmatpush1.bf16.msra.mxu0 0
        %1559 = vmatprep.mubr.bf16.mxu0 0
        %1560 = vmatmul.mubr.bf16.gmra.mrb[0].mxu0 %v1525
        %v1561 = vpop.f32.mrb[0].mxu0
        %v1562 = vadd.f32 0.0, %v1561
        %v1563 = vpop.f32.mrb[0].mxu0
        %v1564 = vpop.f32.mrb[0].mxu0
        %v1565 = vadd.f32 0.0, %v1564
        %v1566 = vpop.f32.mrb[0].mxu0
        %1567 = vdwg.mxu0
        %1568 = vrot.lane.b32.xlu0 %v626, 80
        %v1569 = vpop.permute.xlu0 %1568
        %v1572 = vsel %vm637, %v1520, 0
        %1574 = vmatprep.subr.bf16.mxu0 0
        %1575 = vmatpush1.bf16.msra.mxu0 %v1569
        %1576 = vmatprep.subr.bf16.mxu0 0
        %1577 = vmatpush1.bf16.msra.mxu0 0
        %1578 = vmatprep.subr.bf16.mxu0 0
        %1579 = vmatpush1.bf16.msra.mxu0 0
        %1580 = vmatprep.subr.bf16.mxu0 0
        %1581 = vmatpush1.bf16.msra.mxu0 0
        %1582 = vmatprep.subr.bf16.mxu0 0
        %1583 = vmatpush1.bf16.msra.mxu0 0
        %1584 = vmatprep.subr.bf16.mxu0 0
        %1585 = vmatpush1.bf16.msra.mxu0 0
        %1586 = vmatprep.subr.bf16.mxu0 0
        %1587 = vmatpush1.bf16.msra.mxu0 0
        %1588 = vmatprep.subr.bf16.mxu0 0
        %1589 = vmatpush1.bf16.msra.mxu0 0
        %1590 = vmatprep.subr.bf16.mxu0 0
        %1591 = vmatpush1.bf16.msra.mxu0 0
        %1592 = vmatprep.subr.bf16.mxu0 0
        %1593 = vmatpush1.bf16.msra.mxu0 0
        %1594 = vmatprep.subr.bf16.mxu0 0
        %1595 = vmatpush1.bf16.msra.mxu0 0
        %1596 = vmatprep.subr.bf16.mxu0 0
        %1597 = vmatpush1.bf16.msra.mxu0 0
        %1598 = vmatprep.subr.bf16.mxu0 0
        %1599 = vmatpush1.bf16.msra.mxu0 0
        %1600 = vmatprep.subr.bf16.mxu0 0
        %1601 = vmatpush1.bf16.msra.mxu0 0
        %1602 = vmatprep.subr.bf16.mxu0 0
        %1603 = vmatpush1.bf16.msra.mxu0 0
        %1604 = vmatprep.subr.bf16.mxu0 0
        %1605 = vmatpush1.bf16.msra.mxu0 0
        %1606 = vmatprep.mubr.bf16.mxu0 0
        %1607 = vmatmul.mubr.bf16.gmra.mrb[0].mxu0 %v1572
        %v1608 = vpop.f32.mrb[0].mxu0
        %v1609 = vadd.f32 0.0, %v1608
        %v1610 = vpop.f32.mrb[0].mxu0
        %v1611 = vpop.f32.mrb[0].mxu0
        %v1612 = vadd.f32 0.0, %v1611
        %v1613 = vpop.f32.mrb[0].mxu0
        %1614 = vdwg.mxu0
        %v1615 = vrcp.pop %v1509
        %v1616 = vrcp.pop %v1512
        %v1617 = vrcp.pop %v1515
        %v1618 = vrcp.pop %v1518
        %v1619 = vmul.f32 %v1562, %v1615
        %v1620 = vmul.f32 %v1565, %v1616
        %v1621 = vmul.f32 %v1609, %v1617
        %v1622 = vmul.f32 %v1612, %v1618
        %v1623 = vpack.c.bf16 %v1620, %v1619
        %v1624 = vpack.c.bf16 %v1622, %v1621
        %1627 = vrot.lane.b32.xlu0 %v1127, 16
        %v1628 = vpop.permute.xlu0 %1627
        %1629 = vrot.lane.b32.xlu0 %v1128, 16
        %v1630 = vpop.permute.xlu0 %1629
        %1633 = vrot.lane.b32.xlu0 %v1375, 32
        %v1634 = vpop.permute.xlu0 %1633
        %1635 = vrot.lane.b32.xlu0 %v1376, 32
        %v1636 = vpop.permute.xlu0 %1635
        %1639 = vrot.lane.b32.xlu0 %v1623, 48
        %v1640 = vpop.permute.xlu0 %1639
        %1641 = vrot.lane.b32.xlu0 %v1624, 48
        %v1642 = vpop.permute.xlu0 %1641
        %v1645 = vsel %vm637, %v877, %v1628
        %v1648 = vsel %vm637, %v878, %v1630
        %vm1649 = vcmask 261120
        %v1651 = vsel %vm1649, %v1645, %v1634
        %v1653 = vsel %vm1649, %v1648, %v1636
        %vm1654 = vcmask 392192
        %v1656 = vsel %vm1654, %v1651, %v1640
        %v1658 = vsel %vm1654, %v1653, %v1642
        %v1659 = vld [vmem:[#allocation2] sm:$0xf]
        %v1660 = vld [vmem:[#allocation2 + $0x4] sm:$0xf]
        %v1661 = vld [vmem:[#allocation2 + $0x8] sm:$0xf]
        %v1662 = vld [vmem:[#allocation2 + $0xc] sm:$0xf]
        %v1663 = vld [vmem:[#allocation2 + $0x10] sm:$0xf]
        %v1664 = vld [vmem:[#allocation2 + $0x14] sm:$0xf]
        %v1665 = vld [vmem:[#allocation2 + $0x18] sm:$0xf]
        %v1666 = vld [vmem:[#allocation2 + $0x1c] sm:$0xf]
        %v1675 = vunpack.c.l.b16 %v1659
        %v1676 = vunpack.c.l.b16 %v1660
        %v1677 = vunpack.c.l.b16 %v1661
        %v1678 = vunpack.c.l.b16 %v1662
        %v1679 = vunpack.c.l.b16 %v1663
        %v1680 = vunpack.c.l.b16 %v1664
        %v1681 = vunpack.c.l.b16 %v1665
        %v1682 = vunpack.c.l.b16 %v1666
        %v1683 = vpack.c.b16 %v1676, %v1675
        %v1684 = vpack.c.b16 %v1678, %v1677
        %v1685 = vpack.c.b16 %v1680, %v1679
        %v1686 = vpack.c.b16 %v1682, %v1681
        %v1691 = vsel %vm440, %v1656, 0
        %v1693 = vsel %vm440, %v1658, 0
        %1695 = vmatprep.subr.bf16.mxu0 0
        %1696 = vmatpush1.bf16.msra.mxu0 %v1683
        %1697 = vmatprep.subr.bf16.mxu0 0
        %1698 = vmatpush1.bf16.msra.mxu0 %v1684
        %1699 = vmatprep.subr.bf16.mxu0 0
        %1700 = vmatpush1.bf16.msra.mxu0 %v1685
        %1701 = vmatprep.subr.bf16.mxu0 0
        %1702 = vmatpush1.bf16.msra.mxu0 %v1686
        %1703 = vmatprep.subr.bf16.mxu0 0
        %1704 = vmatpush1.bf16.msra.mxu0 0
        %1705 = vmatprep.subr.bf16.mxu0 0
        %1706 = vmatpush1.bf16.msra.mxu0 0
        %1707 = vmatprep.subr.bf16.mxu0 0
        %1708 = vmatpush1.bf16.msra.mxu0 0
        %1709 = vmatprep.subr.bf16.mxu0 0
        %1710 = vmatpush1.bf16.msra.mxu0 0
        %1711 = vmatprep.subr.bf16.mxu0 0
        %1712 = vmatpush1.bf16.msra.mxu0 0
        %1713 = vmatprep.subr.bf16.mxu0 0
        %1714 = vmatpush1.bf16.msra.mxu0 0
        %1715 = vmatprep.subr.bf16.mxu0 0
        %1716 = vmatpush1.bf16.msra.mxu0 0
        %1717 = vmatprep.subr.bf16.mxu0 0
        %1718 = vmatpush1.bf16.msra.mxu0 0
        %1719 = vmatprep.subr.bf16.mxu0 0
        %1720 = vmatpush1.bf16.msra.mxu0 0
        %1721 = vmatprep.subr.bf16.mxu0 0
        %1722 = vmatpush1.bf16.msra.mxu0 0
        %1723 = vmatprep.subr.bf16.mxu0 0
        %1724 = vmatpush1.bf16.msra.mxu0 0
        %1725 = vmatprep.subr.bf16.mxu0 0
        %1726 = vmatpush1.bf16.msra.mxu0 0
        %1727 = vmatprep.mubr.bf16.mxu0 0
        %1728 = vmatmul.mubr.bf16.gmra.mrb[0].mxu0 %v1691
        %v1729 = vpop.f32.mrb[0].mxu0
        %v1730 = vadd.f32 0.0, %v1729
        %v1731 = vpop.f32.mrb[0].mxu0
        %v1732 = vpop.f32.mrb[0].mxu0
        %v1733 = vadd.f32 0.0, %v1732
        %v1734 = vpop.f32.mrb[0].mxu0
        %1735 = vmatprep.mubr.bf16.mxu0 0
        %1736 = vmatmul.mubr.bf16.gmra.mrb[0].mxu0 %v1693
        %v1737 = vpop.f32.mrb[0].mxu0
        %v1738 = vadd.f32 0.0, %v1737
        %v1739 = vpop.f32.mrb[0].mxu0
        %v1740 = vpop.f32.mrb[0].mxu0
        %v1741 = vadd.f32 0.0, %v1740
        %v1742 = vpop.f32.mrb[0].mxu0
        %1743 = vdwg.mxu0
        %v1744 = vadd.f32 %v434, %v1730
        %v1745 = vadd.f32 %v435, %v1733
        %v1746 = vadd.f32 %v436, %v1738
        %v1747 = vadd.f32 %v437, %v1741
        %v1748 = vld [vmem:[%s5] sm:$0x1]
        %v1750 = vlaneseq
        %v1751 = vshrl.u32 %v1750, 7
        %v1752 = vsub.s32 0, %v1751
        %v1753 = vrot.slane %v1748, %v1752
        %v1755 = vadd.f32 %v1744, %v1753
        %v1756 = vadd.f32 %v1745, %v1753
        %v1757 = vadd.f32 %v1746, %v1753
        %v1758 = vadd.f32 %v1747, %v1753
        %v1759 = vld [vmem:[%s6] sm:$0x1]
        %v1760 = vld [vmem:[%s7] sm:$0x1]
        %v1761 = vsel %vm440, %v1755, 0.0
        %1762 = vadd.xlane.f32.xlu0 %v1761
        %v1763 = vpop.xlane.xlu0 %1762
        %v1764 = vsel %vm440, %v1756, 0.0
        %1765 = vadd.xlane.f32.xlu0 %v1764
        %v1766 = vpop.xlane.xlu0 %1765
        %v1767 = vsel %vm440, %v1757, 0.0
        %1768 = vadd.xlane.f32.xlu0 %v1767
        %v1769 = vpop.xlane.xlu0 %1768
        %v1770 = vsel %vm440, %v1758, 0.0
        %1771 = vadd.xlane.f32.xlu0 %v1770
        %v1772 = vpop.xlane.xlu0 %1771
        %v1773 = vmul.f32 %v1763, %v453
        %v1774 = vmul.f32 %v1766, %v453
        %v1775 = vmul.f32 %v1769, %v453
        %v1776 = vmul.f32 %v1772, %v453
        %v1777 = vsub.f32 %v1755, %v1773
        %v1778 = vsub.f32 %v1756, %v1774
        %v1779 = vsub.f32 %v1757, %v1775
        %v1780 = vsub.f32 %v1758, %v1776
        %v1781 = vmul.f32 %v1777, %v1777
        %v1782 = vmul.f32 %v1778, %v1778
        %v1783 = vmul.f32 %v1779, %v1779
        %v1784 = vmul.f32 %v1780, %v1780
        %v1785 = vsel %vm440, %v1781, 0.0
        %1786 = vadd.xlane.f32.xlu0 %v1785
        %v1787 = vpop.xlane.xlu0 %1786
        %v1788 = vsel %vm440, %v1782, 0.0
        %1789 = vadd.xlane.f32.xlu0 %v1788
        %v1790 = vpop.xlane.xlu0 %1789
        %v1791 = vsel %vm440, %v1783, 0.0
        %1792 = vadd.xlane.f32.xlu0 %v1791
        %v1793 = vpop.xlane.xlu0 %1792
        %v1794 = vsel %vm440, %v1784, 0.0
        %1795 = vadd.xlane.f32.xlu0 %v1794
        %v1796 = vpop.xlane.xlu0 %1795
        %v1797 = vmul.f32 %v1787, %v453
        %v1798 = vmul.f32 %v1790, %v453
        %v1799 = vmul.f32 %v1793, %v453
        %v1800 = vmul.f32 %v1796, %v453
        %v1801 = vadd.f32 %v1797, 1e-05
        %v1802 = vadd.f32 %v1798, 1e-05
        %v1803 = vadd.f32 %v1799, 1e-05
        %v1804 = vadd.f32 %v1800, 1e-05
        %v1805 = vrsqrt.pop %v1801
        %v1806 = vrsqrt.pop %v1802
        %v1807 = vrsqrt.pop %v1803
        %v1808 = vrsqrt.pop %v1804
        %v1809 = vmul.f32 %v1777, %v1805
        %v1810 = vmul.f32 %v1778, %v1806
        %v1811 = vmul.f32 %v1779, %v1807
        %v1812 = vmul.f32 %v1780, %v1808
        %v1814 = vlaneseq
        %v1815 = vshrl.u32 %v1814, 7
        %v1816 = vsub.s32 0, %v1815
        %v1817 = vrot.slane %v1759, %v1816
        %v1819 = vmul.f32 %v1809, %v1817
        %v1820 = vmul.f32 %v1810, %v1817
        %v1821 = vmul.f32 %v1811, %v1817
        %v1822 = vmul.f32 %v1812, %v1817
        %v1824 = vlaneseq
        %v1825 = vshrl.u32 %v1824, 7
        %v1826 = vsub.s32 0, %v1825
        %v1827 = vrot.slane %v1760, %v1826
        %v1829 = vadd.f32 %v1819, %v1827
        %v1830 = vadd.f32 %v1820, %v1827
        %v1831 = vadd.f32 %v1821, %v1827
        %v1832 = vadd.f32 %v1822, %v1827
        %v1833 = vld [vmem:[%s8] sm:$0xff]
        %v1834 = vld [vmem:[%s8 + $0x8] sm:$0xff]
        %v1835 = vld [vmem:[%s8 + $0x10] sm:$0xff]
        %v1836 = vld [vmem:[%s8 + $0x18] sm:$0xff]
        %v1837 = vld [vmem:[%s8 + $0x20] sm:$0xff]
        %v1838 = vld [vmem:[%s8 + $0x28] sm:$0xff]
        %v1839 = vld [vmem:[%s8 + $0x30] sm:$0xff]
        %v1840 = vld [vmem:[%s8 + $0x38] sm:$0xff]
        %v1841 = vpack.c.bf16 %v1830, %v1829
        %v1842 = vpack.c.bf16 %v1832, %v1831
        %v1843 = vld [vmem:[%s9] sm:$0x3]
        %v1845 = vlaneseq
        %v1846 = vshrl.u32 %v1845, 7
        %v1847 = vsub.s32 0, %v1846
        %v1848 = vrot.slane %v1843, %v1847
        %v1849 = vlaneseq
        %v1850 = vshrl.u32 %v1849, 7
        %v1851 = vsub.s32 1, %v1850
        %v1852 = vrot.slane %v1843, %v1851
        %v1863 = vunpack.c.l.b16 %v1833
        %v1864 = vunpack.c.h.b16 %v1833
        %v1865 = vunpack.c.l.b16 %v1834
        %v1866 = vunpack.c.h.b16 %v1834
        %v1867 = vunpack.c.l.b16 %v1835
        %v1868 = vunpack.c.h.b16 %v1835
        %v1869 = vunpack.c.l.b16 %v1836
        %v1870 = vunpack.c.h.b16 %v1836
        %v1871 = vunpack.c.l.b16 %v1837
        %v1872 = vunpack.c.h.b16 %v1837
        %v1873 = vunpack.c.l.b16 %v1838
        %v1874 = vunpack.c.h.b16 %v1838
        %v1875 = vunpack.c.l.b16 %v1839
        %v1876 = vunpack.c.h.b16 %v1839
        %v1877 = vunpack.c.l.b16 %v1840
        %v1878 = vunpack.c.h.b16 %v1840
        %v1879 = vpack.c.b16 %v1865, %v1863
        %v1880 = vpack.c.b16 %v1866, %v1864
        %v1881 = vpack.c.b16 %v1869, %v1867
        %v1882 = vpack.c.b16 %v1870, %v1868
        %v1883 = vpack.c.b16 %v1873, %v1871
        %v1884 = vpack.c.b16 %v1874, %v1872
        %v1885 = vpack.c.b16 %v1877, %v1875
        %v1886 = vpack.c.b16 %v1878, %v1876
        %v1896 = vsel %vm440, %v1841, 0
        %v1899 = vsel %vm440, %v1842, 0
        %1901 = vmatprep.subr.bf16.mxu0 %v1880
        %1902 = vmatpush1.bf16.msra.mxu0 %v1879
        %1903 = vmatprep.subr.bf16.mxu0 %v1882
        %1904 = vmatpush1.bf16.msra.mxu0 %v1881
        %1905 = vmatprep.subr.bf16.mxu0 %v1884
        %1906 = vmatpush1.bf16.msra.mxu0 %v1883
        %1907 = vmatprep.subr.bf16.mxu0 %v1886
        %1908 = vmatpush1.bf16.msra.mxu0 %v1885
        %1909 = vmatprep.subr.bf16.mxu0 0
        %1910 = vmatpush1.bf16.msra.mxu0 0
        %1911 = vmatprep.subr.bf16.mxu0 0
        %1912 = vmatpush1.bf16.msra.mxu0 0
        %1913 = vmatprep.subr.bf16.mxu0 0
        %1914 = vmatpush1.bf16.msra.mxu0 0
        %1915 = vmatprep.subr.bf16.mxu0 0
        %1916 = vmatpush1.bf16.msra.mxu0 0
        %1917 = vmatprep.subr.bf16.mxu0 0
        %1918 = vmatpush1.bf16.msra.mxu0 0
        %1919 = vmatprep.subr.bf16.mxu0 0
        %1920 = vmatpush1.bf16.msra.mxu0 0
        %1921 = vmatprep.subr.bf16.mxu0 0
        %1922 = vmatpush1.bf16.msra.mxu0 0
        %1923 = vmatprep.subr.bf16.mxu0 0
        %1924 = vmatpush1.bf16.msra.mxu0 0
        %1925 = vmatprep.subr.bf16.mxu0 0
        %1926 = vmatpush1.bf16.msra.mxu0 0
        %1927 = vmatprep.subr.bf16.mxu0 0
        %1928 = vmatpush1.bf16.msra.mxu0 0
        %1929 = vmatprep.subr.bf16.mxu0 0
        %1930 = vmatpush1.bf16.msra.mxu0 0
        %1931 = vmatprep.subr.bf16.mxu0 0
        %1932 = vmatpush1.bf16.msra.mxu0 0
        %1933 = vmatprep.mubr.bf16.mxu0 0
        %1934 = vmatmul.mubr.bf16.gmra.mrb[0].mxu0 %v1896
        %v1935 = vpop.f32.mrb[0].mxu0
        %v1936 = vadd.f32 %v1848, %v1935
        %v1937 = vpop.f32.mrb[0].mxu0
        %v1938 = vadd.f32 %v1852, %v1937
        %v1939 = vpop.f32.mrb[0].mxu0
        %v1940 = vadd.f32 %v1848, %v1939
        %v1941 = vpop.f32.mrb[0].mxu0
        %v1942 = vadd.f32 %v1852, %v1941
        %1943 = vmatprep.mubr.bf16.mxu0 0
        %1944 = vmatmul.mubr.bf16.gmra.mrb[0].mxu0 %v1899
        %v1945 = vpop.f32.mrb[0].mxu0
        %v1946 = vadd.f32 %v1848, %v1945
        %v1947 = vpop.f32.mrb[0].mxu0
        %v1948 = vadd.f32 %v1852, %v1947
        %v1949 = vpop.f32.mrb[0].mxu0
        %v1950 = vadd.f32 %v1848, %v1949
        %v1951 = vpop.f32.mrb[0].mxu0
        %v1952 = vadd.f32 %v1852, %v1951
        %1953 = vdwg.mxu0
        %v1954 = vmax.f32 %v1936, 0.0
        %v1955 = vmax.f32 %v1938, 0.0
        %v1956 = vmax.f32 %v1940, 0.0
        %v1957 = vmax.f32 %v1942, 0.0
        %v1958 = vmax.f32 %v1946, 0.0
        %v1959 = vmax.f32 %v1948, 0.0
        %v1960 = vmax.f32 %v1950, 0.0
        %v1961 = vmax.f32 %v1952, 0.0
        %v1962 = vpack.c.bf16 %v1956, %v1954
        %v1963 = vpack.c.bf16 %v1957, %v1955
        %v1964 = vpack.c.bf16 %v1960, %v1958
        %v1965 = vpack.c.bf16 %v1961, %v1959
        %v1966 = vld [vmem:[%s10] sm:$0xf]
        %v1967 = vld [vmem:[%s10 + $0x4] sm:$0xf]
        %v1968 = vld [vmem:[%s10 + $0x8] sm:$0xf]
        %v1969 = vld [vmem:[%s10 + $0xc] sm:$0xf]
        %v1970 = vld [vmem:[%s10 + $0x10] sm:$0xf]
        %v1971 = vld [vmem:[%s10 + $0x14] sm:$0xf]
        %v1972 = vld [vmem:[%s10 + $0x18] sm:$0xf]
        %v1973 = vld [vmem:[%s10 + $0x1c] sm:$0xf]
        %v1974 = vld [vmem:[%s10 + $0x20] sm:$0xf]
        %v1975 = vld [vmem:[%s10 + $0x24] sm:$0xf]
        %v1976 = vld [vmem:[%s10 + $0x28] sm:$0xf]
        %v1977 = vld [vmem:[%s10 + $0x2c] sm:$0xf]
        %v1978 = vld [vmem:[%s10 + $0x30] sm:$0xf]
        %v1979 = vld [vmem:[%s10 + $0x34] sm:$0xf]
        %v1980 = vld [vmem:[%s10 + $0x38] sm:$0xf]
        %v1981 = vld [vmem:[%s10 + $0x3c] sm:$0xf]
        %v1982 = vld [vmem:[%s10 + $0x40] sm:$0xf]
        %v1983 = vld [vmem:[%s10 + $0x44] sm:$0xf]
        %v1984 = vld [vmem:[%s10 + $0x48] sm:$0xf]
        %v1985 = vld [vmem:[%s10 + $0x4c] sm:$0xf]
        %v1986 = vld [vmem:[%s10 + $0x50] sm:$0xf]
        %v1987 = vld [vmem:[%s10 + $0x54] sm:$0xf]
        %v1988 = vld [vmem:[%s10 + $0x58] sm:$0xf]
        %v1989 = vld [vmem:[%s10 + $0x5c] sm:$0xf]
        %v1990 = vld [vmem:[%s10 + $0x60] sm:$0xf]
        %v1991 = vld [vmem:[%s10 + $0x64] sm:$0xf]
        %v1992 = vld [vmem:[%s10 + $0x68] sm:$0xf]
        %v1993 = vld [vmem:[%s10 + $0x6c] sm:$0xf]
        %v1994 = vld [vmem:[%s10 + $0x70] sm:$0xf]
        %v1995 = vld [vmem:[%s10 + $0x74] sm:$0xf]
        %v1996 = vld [vmem:[%s10 + $0x78] sm:$0xf]
        %v1997 = vld [vmem:[%s10 + $0x7c] sm:$0xf]
        %v2030 = vunpack.c.l.b16 %v1966
        %v2031 = vunpack.c.l.b16 %v1967
        %v2032 = vunpack.c.l.b16 %v1968
        %v2033 = vunpack.c.l.b16 %v1969
        %v2034 = vunpack.c.l.b16 %v1970
        %v2035 = vunpack.c.l.b16 %v1971
        %v2036 = vunpack.c.l.b16 %v1972
        %v2037 = vunpack.c.l.b16 %v1973
        %v2038 = vunpack.c.l.b16 %v1974
        %v2039 = vunpack.c.l.b16 %v1975
        %v2040 = vunpack.c.l.b16 %v1976
        %v2041 = vunpack.c.l.b16 %v1977
        %v2042 = vunpack.c.l.b16 %v1978
        %v2043 = vunpack.c.l.b16 %v1979
        %v2044 = vunpack.c.l.b16 %v1980
        %v2045 = vunpack.c.l.b16 %v1981
        %v2046 = vunpack.c.l.b16 %v1982
        %v2047 = vunpack.c.l.b16 %v1983
        %v2048 = vunpack.c.l.b16 %v1984
        %v2049 = vunpack.c.l.b16 %v1985
        %v2050 = vunpack.c.l.b16 %v1986
        %v2051 = vunpack.c.l.b16 %v1987
        %v2052 = vunpack.c.l.b16 %v1988
        %v2053 = vunpack.c.l.b16 %v1989
        %v2054 = vunpack.c.l.b16 %v1990
        %v2055 = vunpack.c.l.b16 %v1991
        %v2056 = vunpack.c.l.b16 %v1992
        %v2057 = vunpack.c.l.b16 %v1993
        %v2058 = vunpack.c.l.b16 %v1994
        %v2059 = vunpack.c.l.b16 %v1995
        %v2060 = vunpack.c.l.b16 %v1996
        %v2061 = vunpack.c.l.b16 %v1997
        %v2062 = vpack.c.b16 %v2031, %v2030
        %v2063 = vpack.c.b16 %v2033, %v2032
        %v2064 = vpack.c.b16 %v2035, %v2034
        %v2065 = vpack.c.b16 %v2037, %v2036
        %v2066 = vpack.c.b16 %v2039, %v2038
        %v2067 = vpack.c.b16 %v2041, %v2040
        %v2068 = vpack.c.b16 %v2043, %v2042
        %v2069 = vpack.c.b16 %v2045, %v2044
        %v2070 = vpack.c.b16 %v2047, %v2046
        %v2071 = vpack.c.b16 %v2049, %v2048
        %v2072 = vpack.c.b16 %v2051, %v2050
        %v2073 = vpack.c.b16 %v2053, %v2052
        %v2074 = vpack.c.b16 %v2055, %v2054
        %v2075 = vpack.c.b16 %v2057, %v2056
        %v2076 = vpack.c.b16 %v2059, %v2058
        %v2077 = vpack.c.b16 %v2061, %v2060
        %2094 = vmatprep.subr.bf16.mxu0 0
        %2095 = vmatpush1.bf16.msra.mxu0 %v2062
        %2096 = vmatprep.subr.bf16.mxu0 0
        %2097 = vmatpush1.bf16.msra.mxu0 %v2063
        %2098 = vmatprep.subr.bf16.mxu0 0
        %2099 = vmatpush1.bf16.msra.mxu0 %v2064
        %2100 = vmatprep.subr.bf16.mxu0 0
        %2101 = vmatpush1.bf16.msra.mxu0 %v2065
        %2102 = vmatprep.subr.bf16.mxu0 0
        %2103 = vmatpush1.bf16.msra.mxu0 %v2066
        %2104 = vmatprep.subr.bf16.mxu0 0
        %2105 = vmatpush1.bf16.msra.mxu0 %v2067
        %2106 = vmatprep.subr.bf16.mxu0 0
        %2107 = vmatpush1.bf16.msra.mxu0 %v2068
        %2108 = vmatprep.subr.bf16.mxu0 0
        %2109 = vmatpush1.bf16.msra.mxu0 %v2069
        %2110 = vmatprep.subr.bf16.mxu0 0
        %2111 = vmatpush1.bf16.msra.mxu0 %v2070
        %2112 = vmatprep.subr.bf16.mxu0 0
        %2113 = vmatpush1.bf16.msra.mxu0 %v2071
        %2114 = vmatprep.subr.bf16.mxu0 0
        %2115 = vmatpush1.bf16.msra.mxu0 %v2072
        %2116 = vmatprep.subr.bf16.mxu0 0
        %2117 = vmatpush1.bf16.msra.mxu0 %v2073
        %2118 = vmatprep.subr.bf16.mxu0 0
        %2119 = vmatpush1.bf16.msra.mxu0 %v2074
        %2120 = vmatprep.subr.bf16.mxu0 0
        %2121 = vmatpush1.bf16.msra.mxu0 %v2075
        %2122 = vmatprep.subr.bf16.mxu0 0
        %2123 = vmatpush1.bf16.msra.mxu0 %v2076
        %2124 = vmatprep.subr.bf16.mxu0 0
        %2125 = vmatpush1.bf16.msra.mxu0 %v2077
        %2126 = vmatprep.mubr.bf16.mxu0 %v1963
        %2127 = vmatmul.mubr.bf16.gmra.mrb[0].mxu0 %v1962
        %v2128 = vpop.f32.mrb[0].mxu0
        %v2129 = vadd.f32 0.0, %v2128
        %v2130 = vpop.f32.mrb[0].mxu0
        %v2131 = vpop.f32.mrb[0].mxu0
        %v2132 = vadd.f32 0.0, %v2131
        %v2133 = vpop.f32.mrb[0].mxu0
        %2134 = vmatprep.mubr.bf16.mxu0 %v1965
        %2135 = vmatmul.mubr.bf16.gmra.mrb[0].mxu0 %v1964
        %v2136 = vpop.f32.mrb[0].mxu0
        %v2137 = vadd.f32 0.0, %v2136
        %v2138 = vpop.f32.mrb[0].mxu0
        %v2139 = vpop.f32.mrb[0].mxu0
        %v2140 = vadd.f32 0.0, %v2139
        %v2141 = vpop.f32.mrb[0].mxu0
        %2142 = vdwg.mxu0
        %v2143 = vadd.f32 %v1755, %v2129
        %v2144 = vadd.f32 %v1756, %v2132
        %v2145 = vadd.f32 %v1757, %v2137
        %v2146 = vadd.f32 %v1758, %v2140
        %v2147 = vld [vmem:[%s11] sm:$0x1]
        %v2149 = vlaneseq
        %v2150 = vshrl.u32 %v2149, 7
        %v2151 = vsub.s32 0, %v2150
        %v2152 = vrot.slane %v2147, %v2151
        %v2154 = vadd.f32 %v2143, %v2152
        %v2155 = vadd.f32 %v2144, %v2152
        %v2156 = vadd.f32 %v2145, %v2152
        %v2157 = vadd.f32 %v2146, %v2152
        %2158 = vst.msk [vmem:[%s424] sm:$0xff] %vm440, %v2154
        %2159 = vst.msk [vmem:[%s424 + $0x8] sm:$0xff] %vm440, %v2155
        %2160 = vst.msk [vmem:[%s424 + $0x10] sm:$0xff] %vm440, %v2156
        %2161 = vst.msk [vmem:[%s424 + $0x18] sm:$0xff] %vm440, %v2157
        %s2162 = sand.u32 %s292, 1
        %s2163 = scalar_lea.sflag [#allocation4], %s2162
        %s2164 = sand.u32 %s292, 1
        %s2165 = smul.addr %s2164, 32
        %s2166 = scalar_lea.vmem [#allocation5], %s2165
        // Predicated region
        $region73: #{tpu_custom_call.1} parent=67 // pred_check
          %p2167 = pneg %p302
        $region74: #{tpu_custom_call.1} parent=67 // pred_check_branch
          %2169 = sbr.rel (%p2167) target = $region76
        $region75: #{tpu_custom_call.1} parent=67 // pred_region
          %s2170 = smul.u32 2, %s27
          %s2172 = ssub.s32 512, 512
          %2173 = vsyncadd %s2163, %s2172
          %s2174 = smul.addr %s2170, 2
          %s2175 = smul.addr %s2174, 128
          %s2176 = scalar_lea.hbm %s12, %s2175
          %s2177 = sshll.u32 %s2166, 4
          %s2178 = int_to_ptr.vmem [resolvable:$true] %s2177
          %2183 = dma.vmem_to_hbm [thread:$0]  %s2178, 512, %s2176, %s2163, 128, 128, 8
        $region76: #{tpu_custom_call.1} parent=67 // pred_fallthru
          _
      $region68: #{tpu_custom_call.1} parent=5 // pred_fallthru
        _
      %p2184 = scmp.le.s32.totalorder 2, %s22
      // Predicated region
      $region77: #{tpu_custom_call.1} parent=5 // pred_check
        %p2185 = pneg %p2184
      $region78: #{tpu_custom_call.1} parent=5 // pred_check_branch
        %2187 = sbr.rel (%p2185) target = $region80
      $region79: #{tpu_custom_call.1} parent=5 // pred_region
        %s2188 = ssub.s32 %s22, 2
        // Predicated region
        $region81: #{tpu_custom_call.1} parent=79 // pred_check
          %p2189 = pneg %p308
        $region82: #{tpu_custom_call.1} parent=79 // pred_check_branch
          %2191 = sbr.rel (%p2189) target = $region84
        $region83: #{tpu_custom_call.1} parent=79 // pred_region
          %s2192 = sand.u32 %s293, 1
          %s2193 = scalar_lea.sflag [#allocation4], %s2192
          %s2194 = sand.u32 %s293, 1
          %s2195 = smul.addr %s2194, 32
          %s2196 = scalar_lea.vmem [#allocation5], %s2195
          %2197 = dma.done %s2193, 512
        $region84: #{tpu_custom_call.1} parent=79 // pred_fallthru
          _
      $region80: #{tpu_custom_call.1} parent=5 // pred_fallthru
        _
    $region6: #{tpu_custom_call.1} parent=1 // loop_footer
      %s26 = sadd.s32 1, %s22
    $region7: #{tpu_custom_call.1} parent=1 // loop_footer_branch
      %21 = sbr.rel target = $region3
    $region8: #{tpu_custom_call.1} parent=1 // loop_exit
      _
    %2198 = vsyncpa [#allocation3], 1
    %s2199 = scalar_lea.sflag [#allocation3], 1
    %2200 = vsyncpa %s2199, 1
    %2201 = vsyncpa [#allocation4], 1
    %s2202 = scalar_lea.sflag [#allocation4], 1
    %2203 = vsyncpa %s2202, 1

</llo_original>
